<compile_context>
chip_gen: v5e
topology: v5e:2x2
jax: 0.10.0
libtpu: 0.0.40
codegen_flags: <defaults>
</compile_context>

<pallas_src>
import jax
import jax.numpy as jnp
from jax import lax
from jax.experimental import pallas as pl
from jax.experimental.pallas import tpu as pltpu

# Left zero-padding of the conv2 scratch so the interior store starts at a
# sublane-aligned (multiple-of-8) offset.
_LPAD = 8


# ------------------------------- kernel ------------------------------------

def _make_bottleneck_kernel(use_im2col):
    def kernel(x_ref, w1_ref, b1_ref, w2_ref, b2_ref, w3_ref, b3_ref,
               o_ref, pad_ref, *im_scratch):
        B, H, W, Cin = x_ref.shape
        P = w1_ref.shape[1]
        M = B * H * W

        xb = x_ref[...]                                      # (B,H,W,Cin) bf16

        # ---- conv1: 1x1 conv == bf16 MXU matmul (BN scale pre-folded) ------
        y1 = jnp.dot(xb.reshape(M, Cin), w1_ref[...],
                     preferred_element_type=jnp.float32)
        y1 = jnp.maximum(y1 + b1_ref[...], 0.0)              # (M, P) f32

        # ---- conv2: 3x3, padding=1 ------------------------------------------
        # Scratch layout (per image): rows [1:H+1] on the free leading axis,
        # cols [_LPAD:_LPAD+W] on the sublane axis -> interior store is at a
        # sublane-aligned offset.  Only the halo actually read by the taps is
        # zeroed, every step (tiny, and safe even if the grid is sharded
        # across TensorCores, unlike a "zero once at program_id==0" scheme).
        Wp = pad_ref.shape[2]                                # == _LPAD + W + 1
        zrow = jnp.zeros((B, 1, Wp, P), pad_ref.dtype)
        zcol = jnp.zeros((B, H + 2, 1, P), pad_ref.dtype)
        pad_ref[:, 0:1, :, :] = zrow                         # top halo row
        pad_ref[:, H + 1:H + 2, :, :] = zrow                 # bottom halo row
        pad_ref[:, :, _LPAD - 1:_LPAD, :] = zcol             # left halo col
        pad_ref[:, :, _LPAD + W:_LPAD + W + 1, :] = zcol     # right halo col
        pad_ref[:, 1:H + 1, _LPAD:_LPAD + W, :] = y1.reshape(B, H, W, P)

        padv = pad_ref[...]                                  # (B,H+2,Wp,P) f32
        # Three W-shifted views (kw = 0,1,2), hoisted out of the kh loop and
        # reused across the three kh taps; kh slices are leading-axis (free).
        # (A pltpu.roll over trailing zero columns could make the kw=0/2 views
        # fully sublane-aligned as well; kept as plain slices for robustness.)
        w_views = [padv[:, :, _LPAD - 1 + kw:_LPAD - 1 + kw + W, :]
                   for kw in range(3)]

        def tap(kh, kw):                                     # (M, P)
            return w_views[kw][:, kh:kh + H, :, :].reshape(M, P)

        if use_im2col:
            # Small planes: build (M, 9P) im2col and contract in a single MXU
            # matmul with K = 9P instead of nine tiny-K pushes.
            im_ref, = im_scratch                             # (M, 9P) bf16
            for kh in range(3):
                for kw in range(3):
                    t = kh * 3 + kw
                    im_ref[:, t * P:(t + 1) * P] = tap(kh, kw).astype(jnp.bfloat16)
            y2 = jnp.dot(im_ref[...], w2_ref[...],
                         preferred_element_type=jnp.float32)
        else:
            # Large planes: nine K = P taps, each already MXU-sized.
            y2 = jnp.zeros((M, P), jnp.float32)
            for kh in range(3):
                for kw in range(3):
                    t = kh * 3 + kw
                    y2 = y2 + jnp.dot(tap(kh, kw).astype(jnp.bfloat16),
                                      w2_ref[t * P:(t + 1) * P, :],
                                      preferred_element_type=jnp.float32)
        y2 = jnp.maximum(y2 + b2_ref[...], 0.0)              # (M, P) f32

        # ---- conv3: 1x1 conv (bf16 MXU) + bias + ReLU ------------------------
        y3 = jnp.dot(y2.astype(jnp.bfloat16), w3_ref[...],
                     preferred_element_type=jnp.float32)
        y3 = jnp.maximum(y3 + b3_ref[...], 0.0)              # (M, Cout) f32

        # ---- identity residual + final ReLU ----------------------------------
        out = jnp.maximum(y3 + xb.reshape(M, Cin).astype(jnp.float32), 0.0)
        o_ref[...] = out.reshape(B, H, W, Cin).astype(o_ref.dtype)

    return kernel


# ------------------------------- wrapper ------------------------------------

def _pick_batch_tile(N, H, W):
    """Images per grid step: aim for >= ~256 matmul rows per step while keeping
    >= 2 grid steps so the batch axis pipelines / shards across TensorCores."""
    if N == 1 or H * W >= 256:
        return 1
    best = 1
    for d in range(1, N + 1):
        if N % d == 0 and d * H * W <= 1024 and N // d >= 2:
            best = d
    return best


def _vmem_bytes_estimate(B, H, W, Cin, P, Cout, use_im2col):
    f32, bf16 = 4, 2
    m = B * H * W
    io = 2 * (m * Cin * bf16 + m * Cout * f32)               # double-buffered blocks
    wts = 2 * ((Cin * P + 9 * P * P + P * Cout) * bf16 + (2 * P + Cout) * f32)
    scratch = B * (H + 2) * (_LPAD + W + 1) * P * f32
    if use_im2col:
        scratch += m * 9 * P * bf16
    live = m * (Cin * f32 + 3 * P * f32 + 2 * Cout * f32)    # y1/y2/y3/residual temps
    live += 3 * B * (H + 2) * W * P * f32                    # W-shifted views
    return io + wts + scratch + live


def bottleneck_pallas_nhwc(x_nhwc_bf16, kparams, block_n=None):
    """Fused Bottleneck forward on NHWC bf16 activations (channels on lanes)."""
    w1, b1, w2, b2, w3, b3 = kparams
    N, H, W, Cin = x_nhwc_bf16.shape
    P = w1.shape[1]
    Cout = w3.shape[1]
    if Cout != Cin:
        raise ValueError("identity residual requires inplanes == planes * 4")
    if block_n is None:
        block_n = _pick_batch_tile(N, H, W)
    if N % block_n != 0:
        raise ValueError("block_n must divide the batch size")

    use_im2col = P < 128
    kernel = _make_bottleneck_kernel(use_im2col)

    scratch = [pltpu.VMEM((block_n, H + 2, _LPAD + W + 1, P), jnp.float32)]
    if use_im2col:
        scratch.append(pltpu.VMEM((block_n * H * W, 9 * P), jnp.bfloat16))

    est = _vmem_bytes_estimate(block_n, H, W, Cin, P, Cout, use_im2col)
    # Explicit scoped-VMEM budget with headroom; capped well under the 64 MiB
    # physical VMEM of the smallest-VMEM generation (v7x).
    vmem_limit = int(min(48 * 1024 * 1024, max(32 * 1024 * 1024, 2 * est)))

    full = lambda a: pl.BlockSpec(a.shape, lambda n: (0,) * a.ndim)

    return pl.pallas_call(
        kernel,
        out_shape=jax.ShapeDtypeStruct((N, H, W, Cout), jnp.float32),
        grid=(N // block_n,),
        in_specs=[
            pl.BlockSpec((block_n, H, W, Cin), lambda n: (n, 0, 0, 0)),   # x
            full(w1), full(b1),                                           # conv1
            full(w2), full(b2),                                           # conv2
            full(w3), full(b3),                                           # conv3
        ],
        out_specs=pl.BlockSpec((block_n, H, W, Cout), lambda n: (n, 0, 0, 0)),
        scratch_shapes=scratch,
        compiler_params=pltpu.CompilerParams(
            dimension_semantics=("parallel",),
            vmem_limit_bytes=vmem_limit),
    )(x_nhwc_bf16, w1, b1, w2, b2, w3, b3)


def prepare_kernel_params(params):
    """Fold BN scale into the conv weights (exact), cast weights to bf16, and
    reshape the 3x3 weight to the (9*planes, planes) im2col layout."""
    (w1, s1, b1, w2, s2, b2, w3, s3, b3) = params
    P = w1.shape[1]
    w1f = (w1 * s1.reshape(1, -1)).astype(jnp.bfloat16)                       # (Cin, P)
    w2f = (w2 * s2.reshape(1, 1, 1, -1)).reshape(9 * P, P).astype(jnp.bfloat16)
    w3f = (w3 * s3.reshape(1, -1)).astype(jnp.bfloat16)                       # (P, 4P)
    f32 = jnp.float32
    return (w1f, b1.astype(f32), w2f, b2.astype(f32), w3f, b3.astype(f32))


def bottleneck_pallas(x_nchw, params, block_n=None):
    """NCHW float32 interface matching the PyTorch module.

    Note: in a full network keep activations NHWC and call
    bottleneck_pallas_nhwc directly so the two transposes below (full HBM
    read+write each) are not paid per block."""
    kparams = prepare_kernel_params(params)
    x = jnp.transpose(x_nchw, (0, 2, 3, 1)).astype(jnp.bfloat16)   # NHWC bf16
    out = bottleneck_pallas_nhwc(x, kparams, block_n=block_n)
    return jnp.transpose(out, (0, 3, 1, 2))                        # NCHW


# ----------------------------- parameter setup -------------------------------

def make_params(key, inplanes, planes, eps=1e-5):
    """Deterministic synthetic conv weights + eval-mode BN folded to scale/bias."""
    exp = 4
    keys = jax.random.split(key, 15)

    def bn_fold(kg, kb, km, kv, c):
        gamma = 1.0 + 0.1 * jax.random.normal(kg, (c,), jnp.float32)
        beta = 0.1 * jax.random.normal(kb, (c,), jnp.float32)
        mean = 0.1 * jax.random.normal(km, (c,), jnp.float32)
        var = jnp.abs(jax.random.normal(kv, (c,), jnp.float32)) + 0.5
        scale = gamma / jnp.sqrt(var + eps)
        bias = beta - mean * scale
        return scale.reshape(1, c), bias.reshape(1, c)

    # conv1: 1x1, inplanes -> planes   (stored as (Cin, Cout))
    w1 = 0.1 * jax.random.normal(keys[0], (inplanes, planes), jnp.float32)
    s1, b1 = bn_fold(keys[1], keys[2], keys[3], keys[4], planes)
    # conv2: 3x3, planes -> planes     (stored HWIO: (3, 3, Cin, Cout))
    w2 = 0.1 * jax.random.normal(keys[5], (3, 3, planes, planes), jnp.float32)
    s2, b2 = bn_fold(keys[6], keys[7], keys[8], keys[9], planes)
    # conv3: 1x1, planes -> planes*4
    w3 = 0.1 * jax.random.normal(keys[10], (planes, planes * exp), jnp.float32)
    s3, b3 = bn_fold(keys[11], keys[12], keys[13], keys[14], planes * exp)

    return (w1, s1, b1, w2, s2, b2, w3, s3, b3)


# ------------------------------ pure-JAX ref ----------------------------------

def bottleneck_ref(x_nchw, params):
    (w1, s1, b1, w2, s2, b2, w3, s3, b3) = params
    x = jnp.transpose(x_nchw, (0, 2, 3, 1))  # NHWC
    dn = ('NHWC', 'HWIO', 'NHWC')

    def cbr(inp, w_hwio, s, b, pad):
        y = lax.conv_general_dilated(inp, w_hwio, (1, 1), pad,
                                     dimension_numbers=dn)
        return jnp.maximum(y * s.reshape(1, 1, 1, -1) + b.reshape(1, 1, 1, -1),
                           0.0)

    y = cbr(x, w1.reshape(1, 1, *w1.shape), s1, b1, 'VALID')
    y = cbr(y, w2, s2, b2, [(1, 1), (1, 1)])
    y = cbr(y, w3.reshape(1, 1, *w3.shape), s3, b3, 'VALID')
    out = jnp.maximum(y + x, 0.0)
    return jnp.transpose(out, (0, 3, 1, 2))


if __name__ == "__main__":
    # Small shapes consistent with the module: inplanes = planes * expansion.
    # (Production ResNeXt channel counts (>=128) fill the 128-lane vregs/MXU;
    # these demo channels necessarily leave most lanes idle.)
    N, inplanes, planes, H, W = 2, 16, 4, 16, 16

    key = jax.random.PRNGKey(0)
    kx, kp = jax.random.split(key)
    x = jax.random.normal(kx, (N, inplanes, H, W), jnp.float32)
    params = make_params(kp, inplanes, planes)

    fwd = jax.jit(bottleneck_pallas)
    out = jax.block_until_ready(fwd(x, params))

    ref = jax.block_until_ready(bottleneck_ref(x, params))
    assert out.shape == (N, inplanes, H, W)
    err = float(jnp.max(jnp.abs(out - ref)))
    # bf16 MXU inputs (per perf review) -> looser tolerance than pure fp32.
    assert jnp.allclose(out, ref, rtol=2e-2, atol=2e-2), err
    print("KERNEL_OK")
</pallas_src>

<mosaic_0001>
module attributes {stable_mosaic.version = 11 : i64} {
  func.func @kernel(%arg0: i32, %arg1: memref<1x16x16x16xbf16, #tpu.memory_space<vmem>>, %arg2: memref<16x4xbf16, #tpu.memory_space<vmem>>, %arg3: memref<1x4xf32, #tpu.memory_space<vmem>>, %arg4: memref<36x4xbf16, #tpu.memory_space<vmem>>, %arg5: memref<1x4xf32, #tpu.memory_space<vmem>>, %arg6: memref<4x16xbf16, #tpu.memory_space<vmem>>, %arg7: memref<1x16xf32, #tpu.memory_space<vmem>>, %arg8: memref<1x16x16x16xf32, #tpu.memory_space<vmem>>, %arg9: memref<1x18x25x4xf32, #tpu.memory_space<vmem>>, %arg10: memref<256x36xbf16, #tpu.memory_space<vmem>>) attributes {dimension_semantics = [#tpu.dimension_semantics<parallel>], iteration_bounds = array<i64: 2>, scalar_prefetch = 0 : i64, scratch_operands = 2 : i64, tpu.core_type = #tpu.core_type<tc>, window_params = [{transform_indices = @transform_0, window_bounds = array<i64: 1, 16, 16, 16>}, {pipeline_mode = #tpu.pipeline_mode<synchronous>, transform_indices = @transform_1, window_bounds = array<i64: 16, 4>}, {pipeline_mode = #tpu.pipeline_mode<synchronous>, transform_indices = @transform_2, window_bounds = array<i64: 1, 4>}, {pipeline_mode = #tpu.pipeline_mode<synchronous>, transform_indices = @transform_3, window_bounds = array<i64: 36, 4>}, {pipeline_mode = #tpu.pipeline_mode<synchronous>, transform_indices = @transform_4, window_bounds = array<i64: 1, 4>}, {pipeline_mode = #tpu.pipeline_mode<synchronous>, transform_indices = @transform_5, window_bounds = array<i64: 4, 16>}, {pipeline_mode = #tpu.pipeline_mode<synchronous>, transform_indices = @transform_6, window_bounds = array<i64: 1, 16>}, {transform_indices = @transform_7, window_bounds = array<i64: 1, 16, 16, 16>}]} {
    %c0 = arith.constant 0 : index
    %c0_0 = arith.constant 0 : index
    %c0_1 = arith.constant 0 : index
    %c0_2 = arith.constant 0 : index
    %0 = vector.load %arg1[%c0, %c0_0, %c0_1, %c0_2] : memref<1x16x16x16xbf16, #tpu.memory_space<vmem>>, vector<1x16x16x16xbf16>
    %1 = vector.shape_cast %0 : vector<1x16x16x16xbf16> to vector<256x16xbf16>
    %c0_3 = arith.constant 0 : index
    %c0_4 = arith.constant 0 : index
    %2 = vector.load %arg2[%c0_3, %c0_4] : memref<16x4xbf16, #tpu.memory_space<vmem>>, vector<16x4xbf16>
    %cst = arith.constant dense<0.000000e+00> : vector<256x4xf32>
    %3 = tpu.matmul %1, %2, %cst {dimension_numbers = #tpu.dot_dimension_numbers<[1], [0], [0], [1], [0, 0, 1, 1], [], []>} : vector<256x16xbf16>, vector<16x4xbf16>, vector<256x4xf32> -> vector<256x4xf32>
    %c0_5 = arith.constant 0 : index
    %c0_6 = arith.constant 0 : index
    %4 = vector.load %arg3[%c0_5, %c0_6] : memref<1x4xf32, #tpu.memory_space<vmem>>, vector<1x4xf32>
    %5 = vector.broadcast %4 : vector<1x4xf32> to vector<256x4xf32>
    %6 = arith.addf %3, %5 : vector<256x4xf32>
    %cst_7 = arith.constant 0.000000e+00 : f32
    %7 = vector.broadcast %cst_7 : f32 to vector<256x4xf32>
    %8 = arith.maximumf %6, %7 : vector<256x4xf32>
    %cst_8 = arith.constant 0.000000e+00 : f32
    %9 = vector.broadcast %cst_8 : f32 to vector<1x1x25x4xf32>
    %cst_9 = arith.constant 0.000000e+00 : f32
    %10 = vector.broadcast %cst_9 : f32 to vector<1x18x1x4xf32>
    %c0_10 = arith.constant 0 : index
    %c0_11 = arith.constant 0 : index
    %c0_12 = arith.constant 0 : index
    %c0_13 = arith.constant 0 : index
    %11 = vector.load %arg9[%c0_10, %c0_11, %c0_12, %c0_13] : memref<1x18x25x4xf32, #tpu.memory_space<vmem>>, vector<1x1x25x4xf32>
    tpu.vector_store %arg9[%c0_10, %c0_11, %c0_12, %c0_13], %9 {strides = array<i32>} : memref<1x18x25x4xf32, #tpu.memory_space<vmem>>, vector<1x1x25x4xf32>,
    %c0_14 = arith.constant 0 : index
    %c17 = arith.constant 17 : index
    %c0_15 = arith.constant 0 : index
    %c0_16 = arith.constant 0 : index
    %12 = vector.load %arg9[%c0_14, %c17, %c0_15, %c0_16] : memref<1x18x25x4xf32, #tpu.memory_space<vmem>>, vector<1x1x25x4xf32>
    tpu.vector_store %arg9[%c0_14, %c17, %c0_15, %c0_16], %9 {strides = array<i32>} : memref<1x18x25x4xf32, #tpu.memory_space<vmem>>, vector<1x1x25x4xf32>,
    %c0_17 = arith.constant 0 : index
    %c0_18 = arith.constant 0 : index
    %c7 = arith.constant 7 : index
    %c0_19 = arith.constant 0 : index
    %13 = vector.load %arg9[%c0_17, %c0_18, %c7, %c0_19] : memref<1x18x25x4xf32, #tpu.memory_space<vmem>>, vector<1x18x1x4xf32>
    tpu.vector_store %arg9[%c0_17, %c0_18, %c7, %c0_19], %10 {strides = array<i32>} : memref<1x18x25x4xf32, #tpu.memory_space<vmem>>, vector<1x18x1x4xf32>,
    %c0_20 = arith.constant 0 : index
    %c0_21 = arith.constant 0 : index
    %c24 = arith.constant 24 : index
    %c0_22 = arith.constant 0 : index
    %14 = vector.load %arg9[%c0_20, %c0_21, %c24, %c0_22] : memref<1x18x25x4xf32, #tpu.memory_space<vmem>>, vector<1x18x1x4xf32>
    tpu.vector_store %arg9[%c0_20, %c0_21, %c24, %c0_22], %10 {strides = array<i32>} : memref<1x18x25x4xf32, #tpu.memory_space<vmem>>, vector<1x18x1x4xf32>,
    %15 = vector.shape_cast %8 : vector<256x4xf32> to vector<1x16x16x4xf32>
    %c0_23 = arith.constant 0 : index
    %c1 = arith.constant 1 : index
    %c8 = arith.constant 8 : index
    %c0_24 = arith.constant 0 : index
    %16 = vector.load %arg9[%c0_23, %c1, %c8, %c0_24] : memref<1x18x25x4xf32, #tpu.memory_space<vmem>>, vector<1x16x16x4xf32>
    tpu.vector_store %arg9[%c0_23, %c1, %c8, %c0_24], %15 {strides = array<i32>} : memref<1x18x25x4xf32, #tpu.memory_space<vmem>>, vector<1x16x16x4xf32>,
    %c0_25 = arith.constant 0 : index
    %c0_26 = arith.constant 0 : index
    %c0_27 = arith.constant 0 : index
    %c0_28 = arith.constant 0 : index
    %17 = vector.load %arg9[%c0_25, %c0_26, %c0_27, %c0_28] : memref<1x18x25x4xf32, #tpu.memory_space<vmem>>, vector<1x18x25x4xf32>
    %18 = vector.extract_strided_slice %17 {offsets = [0, 0, 7, 0], sizes = [1, 18, 16, 4], strides = [1, 1, 1, 1]} : vector<1x18x25x4xf32> to vector<1x18x16x4xf32>
    %19 = vector.extract_strided_slice %17 {offsets = [0, 0, 8, 0], sizes = [1, 18, 16, 4], strides = [1, 1, 1, 1]} : vector<1x18x25x4xf32> to vector<1x18x16x4xf32>
    %20 = vector.extract_strided_slice %17 {offsets = [0, 0, 9, 0], sizes = [1, 18, 16, 4], strides = [1, 1, 1, 1]} : vector<1x18x25x4xf32> to vector<1x18x16x4xf32>
    %21 = vector.extract_strided_slice %18 {offsets = [0, 0, 0, 0], sizes = [1, 16, 16, 4], strides = [1, 1, 1, 1]} : vector<1x18x16x4xf32> to vector<1x16x16x4xf32>
    %22 = vector.shape_cast %21 : vector<1x16x16x4xf32> to vector<256x4xf32>
    %23 = arith.truncf %22 : vector<256x4xf32> to vector<256x4xbf16>
    %c0_29 = arith.constant 0 : index
    %c0_30 = arith.constant 0 : index
    %24 = vector.load %arg10[%c0_29, %c0_30] : memref<256x36xbf16, #tpu.memory_space<vmem>>, vector<256x4xbf16>
    tpu.vector_store %arg10[%c0_29, %c0_30], %23 {strides = array<i32>} : memref<256x36xbf16, #tpu.memory_space<vmem>>, vector<256x4xbf16>,
    %25 = vector.extract_strided_slice %19 {offsets = [0, 0, 0, 0], sizes = [1, 16, 16, 4], strides = [1, 1, 1, 1]} : vector<1x18x16x4xf32> to vector<1x16x16x4xf32>
    %26 = vector.shape_cast %25 : vector<1x16x16x4xf32> to vector<256x4xf32>
    %27 = arith.truncf %26 : vector<256x4xf32> to vector<256x4xbf16>
    %c0_31 = arith.constant 0 : index
    %c4 = arith.constant 4 : index
    %28 = vector.load %arg10[%c0_31, %c4] : memref<256x36xbf16, #tpu.memory_space<vmem>>, vector<256x4xbf16>
    tpu.vector_store %arg10[%c0_31, %c4], %27 {strides = array<i32>} : memref<256x36xbf16, #tpu.memory_space<vmem>>, vector<256x4xbf16>,
    %29 = vector.extract_strided_slice %20 {offsets = [0, 0, 0, 0], sizes = [1, 16, 16, 4], strides = [1, 1, 1, 1]} : vector<1x18x16x4xf32> to vector<1x16x16x4xf32>
    %30 = vector.shape_cast %29 : vector<1x16x16x4xf32> to vector<256x4xf32>
    %31 = arith.truncf %30 : vector<256x4xf32> to vector<256x4xbf16>
    %c0_32 = arith.constant 0 : index
    %c8_33 = arith.constant 8 : index
    %32 = vector.load %arg10[%c0_32, %c8_33] : memref<256x36xbf16, #tpu.memory_space<vmem>>, vector<256x4xbf16>
    tpu.vector_store %arg10[%c0_32, %c8_33], %31 {strides = array<i32>} : memref<256x36xbf16, #tpu.memory_space<vmem>>, vector<256x4xbf16>,
    %33 = vector.extract_strided_slice %18 {offsets = [0, 1, 0, 0], sizes = [1, 16, 16, 4], strides = [1, 1, 1, 1]} : vector<1x18x16x4xf32> to vector<1x16x16x4xf32>
    %34 = vector.shape_cast %33 : vector<1x16x16x4xf32> to vector<256x4xf32>
    %35 = arith.truncf %34 : vector<256x4xf32> to vector<256x4xbf16>
    %c0_34 = arith.constant 0 : index
    %c12 = arith.constant 12 : index
    %36 = vector.load %arg10[%c0_34, %c12] : memref<256x36xbf16, #tpu.memory_space<vmem>>, vector<256x4xbf16>
    tpu.vector_store %arg10[%c0_34, %c12], %35 {strides = array<i32>} : memref<256x36xbf16, #tpu.memory_space<vmem>>, vector<256x4xbf16>,
    %37 = vector.extract_strided_slice %19 {offsets = [0, 1, 0, 0], sizes = [1, 16, 16, 4], strides = [1, 1, 1, 1]} : vector<1x18x16x4xf32> to vector<1x16x16x4xf32>
    %38 = vector.shape_cast %37 : vector<1x16x16x4xf32> to vector<256x4xf32>
    %39 = arith.truncf %38 : vector<256x4xf32> to vector<256x4xbf16>
    %c0_35 = arith.constant 0 : index
    %c16 = arith.constant 16 : index
    %40 = vector.load %arg10[%c0_35, %c16] : memref<256x36xbf16, #tpu.memory_space<vmem>>, vector<256x4xbf16>
    tpu.vector_store %arg10[%c0_35, %c16], %39 {strides = array<i32>} : memref<256x36xbf16, #tpu.memory_space<vmem>>, vector<256x4xbf16>,
    %41 = vector.extract_strided_slice %20 {offsets = [0, 1, 0, 0], sizes = [1, 16, 16, 4], strides = [1, 1, 1, 1]} : vector<1x18x16x4xf32> to vector<1x16x16x4xf32>
    %42 = vector.shape_cast %41 : vector<1x16x16x4xf32> to vector<256x4xf32>
    %43 = arith.truncf %42 : vector<256x4xf32> to vector<256x4xbf16>
    %c0_36 = arith.constant 0 : index
    %c20 = arith.constant 20 : index
    %44 = vector.load %arg10[%c0_36, %c20] : memref<256x36xbf16, #tpu.memory_space<vmem>>, vector<256x4xbf16>
    tpu.vector_store %arg10[%c0_36, %c20], %43 {strides = array<i32>} : memref<256x36xbf16, #tpu.memory_space<vmem>>, vector<256x4xbf16>,
    %45 = vector.extract_strided_slice %18 {offsets = [0, 2, 0, 0], sizes = [1, 16, 16, 4], strides = [1, 1, 1, 1]} : vector<1x18x16x4xf32> to vector<1x16x16x4xf32>
    %46 = vector.shape_cast %45 : vector<1x16x16x4xf32> to vector<256x4xf32>
    %47 = arith.truncf %46 : vector<256x4xf32> to vector<256x4xbf16>
    %c0_37 = arith.constant 0 : index
    %c24_38 = arith.constant 24 : index
    %48 = vector.load %arg10[%c0_37, %c24_38] : memref<256x36xbf16, #tpu.memory_space<vmem>>, vector<256x4xbf16>
    tpu.vector_store %arg10[%c0_37, %c24_38], %47 {strides = array<i32>} : memref<256x36xbf16, #tpu.memory_space<vmem>>, vector<256x4xbf16>,
    %49 = vector.extract_strided_slice %19 {offsets = [0, 2, 0, 0], sizes = [1, 16, 16, 4], strides = [1, 1, 1, 1]} : vector<1x18x16x4xf32> to vector<1x16x16x4xf32>
    %50 = vector.shape_cast %49 : vector<1x16x16x4xf32> to vector<256x4xf32>
    %51 = arith.truncf %50 : vector<256x4xf32> to vector<256x4xbf16>
    %c0_39 = arith.constant 0 : index
    %c28 = arith.constant 28 : index
    %52 = vector.load %arg10[%c0_39, %c28] : memref<256x36xbf16, #tpu.memory_space<vmem>>, vector<256x4xbf16>
    tpu.vector_store %arg10[%c0_39, %c28], %51 {strides = array<i32>} : memref<256x36xbf16, #tpu.memory_space<vmem>>, vector<256x4xbf16>,
    %53 = vector.extract_strided_slice %20 {offsets = [0, 2, 0, 0], sizes = [1, 16, 16, 4], strides = [1, 1, 1, 1]} : vector<1x18x16x4xf32> to vector<1x16x16x4xf32>
    %54 = vector.shape_cast %53 : vector<1x16x16x4xf32> to vector<256x4xf32>
    %55 = arith.truncf %54 : vector<256x4xf32> to vector<256x4xbf16>
    %c0_40 = arith.constant 0 : index
    %c32 = arith.constant 32 : index
    %56 = vector.load %arg10[%c0_40, %c32] : memref<256x36xbf16, #tpu.memory_space<vmem>>, vector<256x4xbf16>
    tpu.vector_store %arg10[%c0_40, %c32], %55 {strides = array<i32>} : memref<256x36xbf16, #tpu.memory_space<vmem>>, vector<256x4xbf16>,
    %c0_41 = arith.constant 0 : index
    %c0_42 = arith.constant 0 : index
    %57 = vector.load %arg10[%c0_41, %c0_42] : memref<256x36xbf16, #tpu.memory_space<vmem>>, vector<256x36xbf16>
    %c0_43 = arith.constant 0 : index
    %c0_44 = arith.constant 0 : index
    %58 = vector.load %arg4[%c0_43, %c0_44] : memref<36x4xbf16, #tpu.memory_space<vmem>>, vector<36x4xbf16>
    %cst_45 = arith.constant dense<0.000000e+00> : vector<256x4xf32>
    %59 = tpu.matmul %57, %58, %cst_45 {dimension_numbers = #tpu.dot_dimension_numbers<[1], [0], [0], [1], [0, 0, 1, 1], [], []>} : vector<256x36xbf16>, vector<36x4xbf16>, vector<256x4xf32> -> vector<256x4xf32>
    %c0_46 = arith.constant 0 : index
    %c0_47 = arith.constant 0 : index
    %60 = vector.load %arg5[%c0_46, %c0_47] : memref<1x4xf32, #tpu.memory_space<vmem>>, vector<1x4xf32>
    %61 = vector.broadcast %60 : vector<1x4xf32> to vector<256x4xf32>
    %62 = arith.addf %59, %61 : vector<256x4xf32>
    %cst_48 = arith.constant 0.000000e+00 : f32
    %63 = vector.broadcast %cst_48 : f32 to vector<256x4xf32>
    %64 = arith.maximumf %62, %63 : vector<256x4xf32>
    %65 = arith.truncf %64 : vector<256x4xf32> to vector<256x4xbf16>
    %c0_49 = arith.constant 0 : index
    %c0_50 = arith.constant 0 : index
    %66 = vector.load %arg6[%c0_49, %c0_50] : memref<4x16xbf16, #tpu.memory_space<vmem>>, vector<4x16xbf16>
    %cst_51 = arith.constant dense<0.000000e+00> : vector<256x16xf32>
    %67 = tpu.matmul %65, %66, %cst_51 {dimension_numbers = #tpu.dot_dimension_numbers<[1], [0], [0], [1], [0, 0, 1, 1], [], []>} : vector<256x4xbf16>, vector<4x16xbf16>, vector<256x16xf32> -> vector<256x16xf32>
    %c0_52 = arith.constant 0 : index
    %c0_53 = arith.constant 0 : index
    %68 = vector.load %arg7[%c0_52, %c0_53] : memref<1x16xf32, #tpu.memory_space<vmem>>, vector<1x16xf32>
    %69 = vector.broadcast %68 : vector<1x16xf32> to vector<256x16xf32>
    %70 = arith.addf %67, %69 : vector<256x16xf32>
    %cst_54 = arith.constant 0.000000e+00 : f32
    %71 = vector.broadcast %cst_54 : f32 to vector<256x16xf32>
    %72 = arith.maximumf %70, %71 : vector<256x16xf32>
    %73 = vector.shape_cast %0 : vector<1x16x16x16xbf16> to vector<256x16xbf16>
    %74 = arith.extf %73 : vector<256x16xbf16> to vector<256x16xf32>
    %75 = arith.addf %72, %74 : vector<256x16xf32>
    %cst_55 = arith.constant 0.000000e+00 : f32
    %76 = vector.broadcast %cst_55 : f32 to vector<256x16xf32>
    %77 = arith.maximumf %75, %76 : vector<256x16xf32>
    %78 = vector.shape_cast %77 : vector<256x16xf32> to vector<1x16x16x16xf32>
    %c0_56 = arith.constant 0 : index
    %c0_57 = arith.constant 0 : index
    %c0_58 = arith.constant 0 : index
    %c0_59 = arith.constant 0 : index
    %79 = vector.load %arg8[%c0_56, %c0_57, %c0_58, %c0_59] : memref<1x16x16x16xf32, #tpu.memory_space<vmem>>, vector<1x16x16x16xf32>
    tpu.vector_store %arg8[%c0_56, %c0_57, %c0_58, %c0_59], %78 {strides = array<i32>} : memref<1x16x16x16xf32, #tpu.memory_space<vmem>>, vector<1x16x16x16xf32>,
    return
  }
  func.func @transform_0(%arg0: i32) -> (i32, i32, i32, i32) {
    %c0_i32 = arith.constant 0 : i32
    %c0_i32_0 = arith.constant 0 : i32
    %c0_i32_1 = arith.constant 0 : i32
    %c0_i32_2 = arith.constant 0 : i32
    return %arg0, %c0_i32, %c0_i32_0, %c0_i32_1 : i32, i32, i32, i32
  }
  func.func @transform_1(%arg0: i32) -> (i32, i32) {
    %c0_i32 = arith.constant 0 : i32
    %c0_i32_0 = arith.constant 0 : i32
    %c0_i32_1 = arith.constant 0 : i32
    return %c0_i32, %c0_i32_0 : i32, i32
  }
  func.func @transform_2(%arg0: i32) -> (i32, i32) {
    %c0_i32 = arith.constant 0 : i32
    %c0_i32_0 = arith.constant 0 : i32
    %c0_i32_1 = arith.constant 0 : i32
    return %c0_i32, %c0_i32_0 : i32, i32
  }
  func.func @transform_3(%arg0: i32) -> (i32, i32) {
    %c0_i32 = arith.constant 0 : i32
    %c0_i32_0 = arith.constant 0 : i32
    %c0_i32_1 = arith.constant 0 : i32
    return %c0_i32, %c0_i32_0 : i32, i32
  }
  func.func @transform_4(%arg0: i32) -> (i32, i32) {
    %c0_i32 = arith.constant 0 : i32
    %c0_i32_0 = arith.constant 0 : i32
    %c0_i32_1 = arith.constant 0 : i32
    return %c0_i32, %c0_i32_0 : i32, i32
  }
  func.func @transform_5(%arg0: i32) -> (i32, i32) {
    %c0_i32 = arith.constant 0 : i32
    %c0_i32_0 = arith.constant 0 : i32
    %c0_i32_1 = arith.constant 0 : i32
    return %c0_i32, %c0_i32_0 : i32, i32
  }
  func.func @transform_6(%arg0: i32) -> (i32, i32) {
    %c0_i32 = arith.constant 0 : i32
    %c0_i32_0 = arith.constant 0 : i32
    %c0_i32_1 = arith.constant 0 : i32
    return %c0_i32, %c0_i32_0 : i32, i32
  }
  func.func @transform_7(%arg0: i32) -> (i32, i32, i32, i32) {
    %c0_i32 = arith.constant 0 : i32
    %c0_i32_0 = arith.constant 0 : i32
    %c0_i32_1 = arith.constant 0 : i32
    %c0_i32_2 = arith.constant 0 : i32
    return %arg0, %c0_i32, %c0_i32_0, %c0_i32_1 : i32, i32, i32, i32
  }
}

</mosaic_0001>

<llo_original>
// kernel: bottleneck_pallas.1
$region0: #{bottleneck_pallas.1}
  #allocation0 [shape = 'u32[]', space=smem, size = 0x4, offset = 0x4, fixed_abs, tag = 'smem constant byte address 0x4 - core index']
  #allocation1 [shape = 'u32[72,128]{1,0:T(1,128)}', space=vmem, size = 0x9000, scoped, tag = 'internal scratch']
  #allocation2 [shape = 'f32[1,18,25,4]{3,2,1,0:T(8,128)}', space=vmem, size = 0x48000, scoped, tag = 'scratch operand']
  #allocation3 [shape = 'bf16[256,36]{1,0:T(8,128)(2,1)}', space=vmem, size = 0x10000, scoped, tag = 'scratch operand']
  %s0 = inlined_call_operand.vmem [shape: bf16[2,16,16,16], index: 0, kind: input, shape index: {}]
  %s1 = inlined_call_operand.vmem [shape: bf16[16,4], index: 1, kind: input, shape index: {}]
  %s2 = inlined_call_operand.vmem [shape: f32[1,4], index: 2, kind: input, shape index: {}]
  %s3 = inlined_call_operand.vmem [shape: bf16[36,4], index: 3, kind: input, shape index: {}]
  %s4 = inlined_call_operand.vmem [shape: f32[1,4], index: 4, kind: input, shape index: {}]
  %s5 = inlined_call_operand.vmem [shape: bf16[4,16], index: 5, kind: input, shape index: {}]
  %s6 = inlined_call_operand.vmem [shape: f32[1,16], index: 6, kind: input, shape index: {}]
  %s7 = inlined_call_operand.vmem [shape: f32[2,16,16,16], index: 7, kind: output, shape index: {}]
  %s8 = sld [smem:[#allocation0]]
  $region61: #{bottleneck_pallas.1} parent=0
    _
  %s10 = ssub.s32 1, %s8
  %s11 = scalar_select 0, %s10, %s8
  loop: start=0, step=1, limit=4
  $region2: #{bottleneck_pallas.1} parent=0 // loop_pre_header
    _
  $region3: #{bottleneck_pallas.1} parent=0 // loop_header
    %s13 = sphi 0, %s17
    %p14 = scmp.ge.s32.totalorder %s13, 4
    %s23 = sphi 0, %s25
    %s26 = sphi 0, %s23
    %s27 = sphi 0, %s26
    %s43 = sphi 0, %s27
    %s47 = sphi 0, %s47
    %s49 = sphi 0, %s47
    %s50 = sphi 0, %s49
    %s64 = sphi 0, %s50
    %s68 = sphi 0, %s68
    %s70 = sphi 0, %s68
    %s71 = sphi 0, %s70
    %s85 = sphi 0, %s71
    %s89 = sphi 0, %s89
    %s91 = sphi 0, %s89
    %s92 = sphi 0, %s91
    %s106 = sphi 0, %s92
    %s110 = sphi 0, %s110
    %s112 = sphi 0, %s110
    %s113 = sphi 0, %s112
    %s127 = sphi 0, %s113
    %s131 = sphi 0, %s131
    %s133 = sphi 0, %s131
    %s134 = sphi 0, %s133
    %s148 = sphi 0, %s134
    %s152 = sphi 0, %s152
    %s154 = sphi 0, %s152
    %s155 = sphi 0, %s154
    %s169 = sphi 0, %s155
    %s175 = sphi 0, %s177
    %s178 = sphi 0, %s175
    %s179 = sphi 0, %s178
    %s195 = sphi 0, %s179
  $region4: #{bottleneck_pallas.1} parent=0 // loop_header_branch
    %16 = sbr.rel (%p14) target = $region8
  $region5: #{bottleneck_pallas.1} parent=0 // loop_body
    %s18 = ssub.s32 %s13, 1
    %s19 = ssub.s32 %s13, 2
    %s20 = sadd.s32 %s13, 1
    %s21 = ssub.s32 %s13, %s20
    %p22 = scmp.eq.s32.totalorder %s21, 0
    %s24 = sadd.s32 %s23, 1
    %s25 = scalar_select %p22, %s23, %s24
    %p28 = pneg %p22
    %p29 = scmp.eq.s32.totalorder %s13, 1
    %p30 = por %p28, %p29
    %p31 = scmp.ne.s32.totalorder %s23, %s26
    %p32 = scmp.eq.s32.totalorder %s13, 0
    %p33 = por %p31, %p32
    %p34 = scmp.ne.s32.totalorder %s23, %s26
    %p35 = scmp.eq.s32.totalorder %s18, 1
    %p36 = por %p34, %p35
    %p37 = scmp.ne.s32.totalorder %s26, %s27
    %p38 = scmp.eq.s32.totalorder %s18, 0
    %p39 = por %p37, %p38
    %p40 = scmp.ne.s32.totalorder %s26, %s27
    %p41 = scmp.eq.s32.totalorder %s19, 1
    %p42 = por %p40, %p41
    %p44 = scmp.ne.s32.totalorder %s27, %s43
    %p45 = scmp.eq.s32.totalorder %s19, 0
    %p46 = por %p44, %p45
    %s48 = sadd.s32 %s47, 1
    %p51 = scmp.eq.s32.totalorder %s13, 1
    %p52 = scmp.ne.s32.totalorder %s47, %s49
    %p53 = scmp.eq.s32.totalorder %s13, 0
    %p54 = por %p52, %p53
    %p55 = scmp.ne.s32.totalorder %s47, %s49
    %p56 = scmp.eq.s32.totalorder %s18, 1
    %p57 = por %p55, %p56
    %p58 = scmp.ne.s32.totalorder %s49, %s50
    %p59 = scmp.eq.s32.totalorder %s18, 0
    %p60 = por %p58, %p59
    %p61 = scmp.ne.s32.totalorder %s49, %s50
    %p62 = scmp.eq.s32.totalorder %s19, 1
    %p63 = por %p61, %p62
    %p65 = scmp.ne.s32.totalorder %s50, %s64
    %p66 = scmp.eq.s32.totalorder %s19, 0
    %p67 = por %p65, %p66
    %s69 = sadd.s32 %s68, 1
    %p72 = scmp.eq.s32.totalorder %s13, 1
    %p73 = scmp.ne.s32.totalorder %s68, %s70
    %p74 = scmp.eq.s32.totalorder %s13, 0
    %p75 = por %p73, %p74
    %p76 = scmp.ne.s32.totalorder %s68, %s70
    %p77 = scmp.eq.s32.totalorder %s18, 1
    %p78 = por %p76, %p77
    %p79 = scmp.ne.s32.totalorder %s70, %s71
    %p80 = scmp.eq.s32.totalorder %s18, 0
    %p81 = por %p79, %p80
    %p82 = scmp.ne.s32.totalorder %s70, %s71
    %p83 = scmp.eq.s32.totalorder %s19, 1
    %p84 = por %p82, %p83
    %p86 = scmp.ne.s32.totalorder %s71, %s85
    %p87 = scmp.eq.s32.totalorder %s19, 0
    %p88 = por %p86, %p87
    %s90 = sadd.s32 %s89, 1
    %p93 = scmp.eq.s32.totalorder %s13, 1
    %p94 = scmp.ne.s32.totalorder %s89, %s91
    %p95 = scmp.eq.s32.totalorder %s13, 0
    %p96 = por %p94, %p95
    %p97 = scmp.ne.s32.totalorder %s89, %s91
    %p98 = scmp.eq.s32.totalorder %s18, 1
    %p99 = por %p97, %p98
    %p100 = scmp.ne.s32.totalorder %s91, %s92
    %p101 = scmp.eq.s32.totalorder %s18, 0
    %p102 = por %p100, %p101
    %p103 = scmp.ne.s32.totalorder %s91, %s92
    %p104 = scmp.eq.s32.totalorder %s19, 1
    %p105 = por %p103, %p104
    %p107 = scmp.ne.s32.totalorder %s92, %s106
    %p108 = scmp.eq.s32.totalorder %s19, 0
    %p109 = por %p107, %p108
    %s111 = sadd.s32 %s110, 1
    %p114 = scmp.eq.s32.totalorder %s13, 1
    %p115 = scmp.ne.s32.totalorder %s110, %s112
    %p116 = scmp.eq.s32.totalorder %s13, 0
    %p117 = por %p115, %p116
    %p118 = scmp.ne.s32.totalorder %s110, %s112
    %p119 = scmp.eq.s32.totalorder %s18, 1
    %p120 = por %p118, %p119
    %p121 = scmp.ne.s32.totalorder %s112, %s113
    %p122 = scmp.eq.s32.totalorder %s18, 0
    %p123 = por %p121, %p122
    %p124 = scmp.ne.s32.totalorder %s112, %s113
    %p125 = scmp.eq.s32.totalorder %s19, 1
    %p126 = por %p124, %p125
    %p128 = scmp.ne.s32.totalorder %s113, %s127
    %p129 = scmp.eq.s32.totalorder %s19, 0
    %p130 = por %p128, %p129
    %s132 = sadd.s32 %s131, 1
    %p135 = scmp.eq.s32.totalorder %s13, 1
    %p136 = scmp.ne.s32.totalorder %s131, %s133
    %p137 = scmp.eq.s32.totalorder %s13, 0
    %p138 = por %p136, %p137
    %p139 = scmp.ne.s32.totalorder %s131, %s133
    %p140 = scmp.eq.s32.totalorder %s18, 1
    %p141 = por %p139, %p140
    %p142 = scmp.ne.s32.totalorder %s133, %s134
    %p143 = scmp.eq.s32.totalorder %s18, 0
    %p144 = por %p142, %p143
    %p145 = scmp.ne.s32.totalorder %s133, %s134
    %p146 = scmp.eq.s32.totalorder %s19, 1
    %p147 = por %p145, %p146
    %p149 = scmp.ne.s32.totalorder %s134, %s148
    %p150 = scmp.eq.s32.totalorder %s19, 0
    %p151 = por %p149, %p150
    %s153 = sadd.s32 %s152, 1
    %p156 = scmp.eq.s32.totalorder %s13, 1
    %p157 = scmp.ne.s32.totalorder %s152, %s154
    %p158 = scmp.eq.s32.totalorder %s13, 0
    %p159 = por %p157, %p158
    %p160 = scmp.ne.s32.totalorder %s152, %s154
    %p161 = scmp.eq.s32.totalorder %s18, 1
    %p162 = por %p160, %p161
    %p163 = scmp.ne.s32.totalorder %s154, %s155
    %p164 = scmp.eq.s32.totalorder %s18, 0
    %p165 = por %p163, %p164
    %p166 = scmp.ne.s32.totalorder %s154, %s155
    %p167 = scmp.eq.s32.totalorder %s19, 1
    %p168 = por %p166, %p167
    %p170 = scmp.ne.s32.totalorder %s155, %s169
    %p171 = scmp.eq.s32.totalorder %s19, 0
    %p172 = por %p170, %p171
    %s173 = ssub.s32 %s13, %s20
    %p174 = scmp.eq.s32.totalorder %s173, 0
    %s176 = sadd.s32 %s175, 1
    %s177 = scalar_select %p174, %s175, %s176
    %p180 = pneg %p174
    %p181 = scmp.eq.s32.totalorder %s13, 1
    %p182 = por %p180, %p181
    %p183 = scmp.ne.s32.totalorder %s175, %s178
    %p184 = scmp.eq.s32.totalorder %s13, 0
    %p185 = por %p183, %p184
    %p186 = scmp.ne.s32.totalorder %s175, %s178
    %p187 = scmp.eq.s32.totalorder %s18, 1
    %p188 = por %p186, %p187
    %p189 = scmp.ne.s32.totalorder %s178, %s179
    %p190 = scmp.eq.s32.totalorder %s18, 0
    %p191 = por %p189, %p190
    %p192 = scmp.ne.s32.totalorder %s178, %s179
    %p193 = scmp.eq.s32.totalorder %s19, 1
    %p194 = por %p192, %p193
    %p196 = scmp.ne.s32.totalorder %s179, %s195
    %p197 = scmp.eq.s32.totalorder %s19, 0
    %p198 = por %p196, %p197
    %p199 = scmp.le.s32.totalorder 1, %s13
    %p200 = scmp.lt.s32.totalorder %s13, 3
    %p201 = pnand %p199, %p200
    %p202 = pneg %p201
    // Predicated region
    $region9: #{bottleneck_pallas.1} parent=5 // pred_check
      _
    $region10: #{bottleneck_pallas.1} parent=5 // pred_check_branch
      %204 = sbr.rel (%p201) target = $region12
    $region11: #{bottleneck_pallas.1} parent=5 // pred_region
      %s205 = ssub.s32 %s13, 1
      // Predicated region
      $region13: #{bottleneck_pallas.1} parent=11 // pred_check
        %p206 = pneg %p60
      $region14: #{bottleneck_pallas.1} parent=11 // pred_check_branch
        %208 = sbr.rel (%p206) target = $region16
      $region15: #{bottleneck_pallas.1} parent=11 // pred_region
        _
      $region16: #{bottleneck_pallas.1} parent=11 // pred_fallthru
        _
      // Predicated region
      $region17: #{bottleneck_pallas.1} parent=11 // pred_check
        %p209 = pneg %p81
      $region18: #{bottleneck_pallas.1} parent=11 // pred_check_branch
        %211 = sbr.rel (%p209) target = $region20
      $region19: #{bottleneck_pallas.1} parent=11 // pred_region
        _
      $region20: #{bottleneck_pallas.1} parent=11 // pred_fallthru
        _
      // Predicated region
      $region21: #{bottleneck_pallas.1} parent=11 // pred_check
        %p212 = pneg %p102
      $region22: #{bottleneck_pallas.1} parent=11 // pred_check_branch
        %214 = sbr.rel (%p212) target = $region24
      $region23: #{bottleneck_pallas.1} parent=11 // pred_region
        _
      $region24: #{bottleneck_pallas.1} parent=11 // pred_fallthru
        _
      // Predicated region
      $region25: #{bottleneck_pallas.1} parent=11 // pred_check
        %p215 = pneg %p123
      $region26: #{bottleneck_pallas.1} parent=11 // pred_check_branch
        %217 = sbr.rel (%p215) target = $region28
      $region27: #{bottleneck_pallas.1} parent=11 // pred_region
        _
      $region28: #{bottleneck_pallas.1} parent=11 // pred_fallthru
        _
      // Predicated region
      $region29: #{bottleneck_pallas.1} parent=11 // pred_check
        %p218 = pneg %p144
      $region30: #{bottleneck_pallas.1} parent=11 // pred_check_branch
        %220 = sbr.rel (%p218) target = $region32
      $region31: #{bottleneck_pallas.1} parent=11 // pred_region
        _
      $region32: #{bottleneck_pallas.1} parent=11 // pred_fallthru
        _
      // Predicated region
      $region33: #{bottleneck_pallas.1} parent=11 // pred_check
        %p221 = pneg %p165
      $region34: #{bottleneck_pallas.1} parent=11 // pred_check_branch
        %223 = sbr.rel (%p221) target = $region36
      $region35: #{bottleneck_pallas.1} parent=11 // pred_region
        _
      $region36: #{bottleneck_pallas.1} parent=11 // pred_fallthru
        _
    $region12: #{bottleneck_pallas.1} parent=5 // pred_fallthru
      _
    %p224 = scmp.lt.s32.totalorder %s13, 2
    // Predicated region
    $region37: #{bottleneck_pallas.1} parent=5 // pred_check
      %p225 = pneg %p224
    $region38: #{bottleneck_pallas.1} parent=5 // pred_check_branch
      %227 = sbr.rel (%p225) target = $region40
    $region39: #{bottleneck_pallas.1} parent=5 // pred_region
      // Predicated region
      $region41: #{bottleneck_pallas.1} parent=39 // pred_check
        %p228 = pneg %p33
      $region42: #{bottleneck_pallas.1} parent=39 // pred_check_branch
        %230 = sbr.rel (%p228) target = $region44
      $region43: #{bottleneck_pallas.1} parent=39 // pred_region
        %p231 = scmp.lt.s32.totalorder %s13, 1
        %s232 = scalar_select %p231, %s13, 1
        %s233 = smul.addr %s232, 32
        %s234 = smul.addr %s233, 4
        %s235 = scalar_lea.vmem %s0, %s234
      $region44: #{bottleneck_pallas.1} parent=39 // pred_fallthru
        _
    $region40: #{bottleneck_pallas.1} parent=5 // pred_fallthru
      _
    %p236 = scmp.le.s32.totalorder 1, %s13
    %p237 = scmp.lt.s32.totalorder %s13, 3
    %p238 = pnand %p236, %p237
    %p239 = pneg %p238
    // Predicated region
    $region45: #{bottleneck_pallas.1} parent=5 // pred_check
      _
    $region46: #{bottleneck_pallas.1} parent=5 // pred_check_branch
      %241 = sbr.rel (%p238) target = $region48
    $region47: #{bottleneck_pallas.1} parent=5 // pred_region
      %s242 = ssub.s32 %s13, 1
      %p243 = scmp.lt.s32.totalorder %s18, 1
      %s244 = scalar_select %p243, %s18, 1
      %s245 = smul.addr %s244, 32
      %s246 = smul.addr %s245, 4
      %s247 = scalar_lea.vmem %s0, %s246
      %p248 = pneg %p39
      %p249 = pneg %p36
      %p250 = pneg %p60
      %p251 = pneg %p57
      %p252 = pneg %p81
      %p253 = pneg %p78
      %p254 = pneg %p102
      %p255 = pneg %p99
      %p256 = pneg %p123
      %p257 = pneg %p120
      %p258 = pneg %p144
      %p259 = pneg %p141
      %p260 = pneg %p165
      %p261 = pneg %p162
      %p262 = pneg %p191
      %p263 = pneg %p188
      %p264 = scmp.lt.s32.totalorder %s18, 1
      %s265 = scalar_select %p264, %s18, 1
      %s266 = smul.addr %s265, 32
      %s267 = smul.addr %s266, 8
      %s268 = scalar_lea.vmem %s7, %s267
      %p269 = scmp.lt.s32.totalorder %s18, 1
      %s270 = scalar_select %p269, %s18, 1
      %s271 = smul.addr %s270, 32
      %s272 = smul.addr %s271, 4
      %s273 = scalar_lea.vmem %s0, %s272
      %p274 = scmp.lt.s32.totalorder %s18, 1
      %s275 = scalar_select %p274, %s18, 1
      %s276 = smul.addr %s275, 32
      %s277 = smul.addr %s276, 8
      %s278 = scalar_lea.vmem %s7, %s277
      %v280 = vld [vmem:[%s273] sm:$0xf]
      %v281 = vld [vmem:[%s273 + $0x4] sm:$0xf]
      %v282 = vld [vmem:[%s273 + $0x8] sm:$0xf]
      %v283 = vld [vmem:[%s273 + $0xc] sm:$0xf]
      %v284 = vld [vmem:[%s273 + $0x10] sm:$0xf]
      %v285 = vld [vmem:[%s273 + $0x14] sm:$0xf]
      %v286 = vld [vmem:[%s273 + $0x18] sm:$0xf]
      %v287 = vld [vmem:[%s273 + $0x1c] sm:$0xf]
      %v288 = vld [vmem:[%s273 + $0x20] sm:$0xf]
      %v289 = vld [vmem:[%s273 + $0x24] sm:$0xf]
      %v290 = vld [vmem:[%s273 + $0x28] sm:$0xf]
      %v291 = vld [vmem:[%s273 + $0x2c] sm:$0xf]
      %v292 = vld [vmem:[%s273 + $0x30] sm:$0xf]
      %v293 = vld [vmem:[%s273 + $0x34] sm:$0xf]
      %v294 = vld [vmem:[%s273 + $0x38] sm:$0xf]
      %v295 = vld [vmem:[%s273 + $0x3c] sm:$0xf]
      %v296 = vld [vmem:[%s273 + $0x40] sm:$0xf]
      %v297 = vld [vmem:[%s273 + $0x44] sm:$0xf]
      %v298 = vld [vmem:[%s273 + $0x48] sm:$0xf]
      %v299 = vld [vmem:[%s273 + $0x4c] sm:$0xf]
      %v300 = vld [vmem:[%s273 + $0x50] sm:$0xf]
      %v301 = vld [vmem:[%s273 + $0x54] sm:$0xf]
      %v302 = vld [vmem:[%s273 + $0x58] sm:$0xf]
      %v303 = vld [vmem:[%s273 + $0x5c] sm:$0xf]
      %v304 = vld [vmem:[%s273 + $0x60] sm:$0xf]
      %v305 = vld [vmem:[%s273 + $0x64] sm:$0xf]
      %v306 = vld [vmem:[%s273 + $0x68] sm:$0xf]
      %v307 = vld [vmem:[%s273 + $0x6c] sm:$0xf]
      %v308 = vld [vmem:[%s273 + $0x70] sm:$0xf]
      %v309 = vld [vmem:[%s273 + $0x74] sm:$0xf]
      %v310 = vld [vmem:[%s273 + $0x78] sm:$0xf]
      %v311 = vld [vmem:[%s273 + $0x7c] sm:$0xf]
      %v312 = vld [vmem:[%s1] sm:$0xf]
      %v313 = vld [vmem:[%s1 + $0x4] sm:$0xf]
      %v314 = vld [vmem:[%s2] sm:$0x1]
      %v316 = vperm.slane %v314, 0
      %v350 = vunpack.c.l.b16 %v280
      %v351 = vunpack.c.l.b16 %v281
      %v352 = vunpack.c.l.b16 %v282
      %v353 = vunpack.c.l.b16 %v283
      %v354 = vunpack.c.l.b16 %v284
      %v355 = vunpack.c.l.b16 %v285
      %v356 = vunpack.c.l.b16 %v286
      %v357 = vunpack.c.l.b16 %v287
      %v358 = vunpack.c.l.b16 %v288
      %v359 = vunpack.c.l.b16 %v289
      %v360 = vunpack.c.l.b16 %v290
      %v361 = vunpack.c.l.b16 %v291
      %v362 = vunpack.c.l.b16 %v292
      %v363 = vunpack.c.l.b16 %v293
      %v364 = vunpack.c.l.b16 %v294
      %v365 = vunpack.c.l.b16 %v295
      %v366 = vunpack.c.l.b16 %v296
      %v367 = vunpack.c.l.b16 %v297
      %v368 = vunpack.c.l.b16 %v298
      %v369 = vunpack.c.l.b16 %v299
      %v370 = vunpack.c.l.b16 %v300
      %v371 = vunpack.c.l.b16 %v301
      %v372 = vunpack.c.l.b16 %v302
      %v373 = vunpack.c.l.b16 %v303
      %v374 = vunpack.c.l.b16 %v304
      %v375 = vunpack.c.l.b16 %v305
      %v376 = vunpack.c.l.b16 %v306
      %v377 = vunpack.c.l.b16 %v307
      %v378 = vunpack.c.l.b16 %v308
      %v379 = vunpack.c.l.b16 %v309
      %v380 = vunpack.c.l.b16 %v310
      %v381 = vunpack.c.l.b16 %v311
      %v382 = vpack.c.b16 %v351, %v350
      %v383 = vpack.c.b16 %v353, %v352
      %v384 = vpack.c.b16 %v355, %v354
      %v385 = vpack.c.b16 %v357, %v356
      %v386 = vpack.c.b16 %v359, %v358
      %v387 = vpack.c.b16 %v361, %v360
      %v388 = vpack.c.b16 %v363, %v362
      %v389 = vpack.c.b16 %v365, %v364
      %v390 = vpack.c.b16 %v367, %v366
      %v391 = vpack.c.b16 %v369, %v368
      %v392 = vpack.c.b16 %v371, %v370
      %v393 = vpack.c.b16 %v373, %v372
      %v394 = vpack.c.b16 %v375, %v374
      %v395 = vpack.c.b16 %v377, %v376
      %v396 = vpack.c.b16 %v379, %v378
      %v397 = vpack.c.b16 %v381, %v380
      %v400 = vunpack.c.l.b16 %v312
      %v401 = vunpack.c.l.b16 %v313
      %v402 = vpack.c.b16 %v401, %v400
      %vm404 = vcmask 130048
      %v406 = vsel %vm404, %v382, 0
      %v409 = vsel %vm404, %v383, 0
      %v412 = vsel %vm404, %v384, 0
      %v415 = vsel %vm404, %v385, 0
      %v418 = vsel %vm404, %v386, 0
      %v421 = vsel %vm404, %v387, 0
      %v424 = vsel %vm404, %v388, 0
      %v427 = vsel %vm404, %v389, 0
      %v430 = vsel %vm404, %v390, 0
      %v433 = vsel %vm404, %v391, 0
      %v436 = vsel %vm404, %v392, 0
      %v439 = vsel %vm404, %v393, 0
      %v442 = vsel %vm404, %v394, 0
      %v445 = vsel %vm404, %v395, 0
      %v448 = vsel %vm404, %v396, 0
      %v451 = vsel %vm404, %v397, 0
      %453 = vmatpush.bf16.msra.mxu0 0
      %454 = vmatpush.bf16.msra.mxu0 0
      %455 = vmatpush.bf16.msra.mxu0 0
      %456 = vmatpush.bf16.msra.mxu0 0
      %457 = vmatpush.bf16.msra.mxu0 0
      %458 = vmatpush.bf16.msra.mxu0 0
      %459 = vmatpush.bf16.msra.mxu0 0
      %460 = vmatpush.bf16.msra.mxu0 %v402
      %461 = vmatmul.bf16.gmra.mxu0 %v406
      %v462 = vpop.f32.mrf.mxu0
      %v463 = vadd.f32 %v316, %v462
      %v464 = vpop.f32.mrf.mxu0
      %v465 = vadd.f32 %v316, %v464
      %466 = vmatmul.bf16.gmra.mxu0 %v409
      %v467 = vpop.f32.mrf.mxu0
      %v468 = vadd.f32 %v316, %v467
      %v469 = vpop.f32.mrf.mxu0
      %v470 = vadd.f32 %v316, %v469
      %471 = vmatmul.bf16.gmra.mxu0 %v412
      %v472 = vpop.f32.mrf.mxu0
      %v473 = vadd.f32 %v316, %v472
      %v474 = vpop.f32.mrf.mxu0
      %v475 = vadd.f32 %v316, %v474
      %476 = vmatmul.bf16.gmra.mxu0 %v415
      %v477 = vpop.f32.mrf.mxu0
      %v478 = vadd.f32 %v316, %v477
      %v479 = vpop.f32.mrf.mxu0
      %v480 = vadd.f32 %v316, %v479
      %481 = vmatmul.bf16.gmra.mxu0 %v418
      %v482 = vpop.f32.mrf.mxu0
      %v483 = vadd.f32 %v316, %v482
      %v484 = vpop.f32.mrf.mxu0
      %v485 = vadd.f32 %v316, %v484
      %486 = vmatmul.bf16.gmra.mxu0 %v421
      %v487 = vpop.f32.mrf.mxu0
      %v488 = vadd.f32 %v316, %v487
      %v489 = vpop.f32.mrf.mxu0
      %v490 = vadd.f32 %v316, %v489
      %491 = vmatmul.bf16.gmra.mxu0 %v424
      %v492 = vpop.f32.mrf.mxu0
      %v493 = vadd.f32 %v316, %v492
      %v494 = vpop.f32.mrf.mxu0
      %v495 = vadd.f32 %v316, %v494
      %496 = vmatmul.bf16.gmra.mxu0 %v427
      %v497 = vpop.f32.mrf.mxu0
      %v498 = vadd.f32 %v316, %v497
      %v499 = vpop.f32.mrf.mxu0
      %v500 = vadd.f32 %v316, %v499
      %501 = vmatmul.bf16.gmra.mxu0 %v430
      %v502 = vpop.f32.mrf.mxu0
      %v503 = vadd.f32 %v316, %v502
      %v504 = vpop.f32.mrf.mxu0
      %v505 = vadd.f32 %v316, %v504
      %506 = vmatmul.bf16.gmra.mxu0 %v433
      %v507 = vpop.f32.mrf.mxu0
      %v508 = vadd.f32 %v316, %v507
      %v509 = vpop.f32.mrf.mxu0
      %v510 = vadd.f32 %v316, %v509
      %511 = vmatmul.bf16.gmra.mxu0 %v436
      %v512 = vpop.f32.mrf.mxu0
      %v513 = vadd.f32 %v316, %v512
      %v514 = vpop.f32.mrf.mxu0
      %v515 = vadd.f32 %v316, %v514
      %516 = vmatmul.bf16.gmra.mxu0 %v439
      %v517 = vpop.f32.mrf.mxu0
      %v518 = vadd.f32 %v316, %v517
      %v519 = vpop.f32.mrf.mxu0
      %v520 = vadd.f32 %v316, %v519
      %521 = vmatmul.bf16.gmra.mxu0 %v442
      %v522 = vpop.f32.mrf.mxu0
      %v523 = vadd.f32 %v316, %v522
      %v524 = vpop.f32.mrf.mxu0
      %v525 = vadd.f32 %v316, %v524
      %526 = vmatmul.bf16.gmra.mxu0 %v445
      %v527 = vpop.f32.mrf.mxu0
      %v528 = vadd.f32 %v316, %v527
      %v529 = vpop.f32.mrf.mxu0
      %v530 = vadd.f32 %v316, %v529
      %531 = vmatmul.bf16.gmra.mxu0 %v448
      %v532 = vpop.f32.mrf.mxu0
      %v533 = vadd.f32 %v316, %v532
      %v534 = vpop.f32.mrf.mxu0
      %v535 = vadd.f32 %v316, %v534
      %536 = vmatmul.bf16.gmra.mxu0 %v451
      %v537 = vpop.f32.mrf.mxu0
      %v538 = vadd.f32 %v316, %v537
      %v539 = vpop.f32.mrf.mxu0
      %v540 = vadd.f32 %v316, %v539
      %541 = vdwg.mxu0
      %v542 = vmax.f32 %v463, 0.0
      %v543 = vmax.f32 %v465, 0.0
      %v544 = vmax.f32 %v468, 0.0
      %v545 = vmax.f32 %v470, 0.0
      %v546 = vmax.f32 %v473, 0.0
      %v547 = vmax.f32 %v475, 0.0
      %v548 = vmax.f32 %v478, 0.0
      %v549 = vmax.f32 %v480, 0.0
      %v550 = vmax.f32 %v483, 0.0
      %v551 = vmax.f32 %v485, 0.0
      %v552 = vmax.f32 %v488, 0.0
      %v553 = vmax.f32 %v490, 0.0
      %v554 = vmax.f32 %v493, 0.0
      %v555 = vmax.f32 %v495, 0.0
      %v556 = vmax.f32 %v498, 0.0
      %v557 = vmax.f32 %v500, 0.0
      %v558 = vmax.f32 %v503, 0.0
      %v559 = vmax.f32 %v505, 0.0
      %v560 = vmax.f32 %v508, 0.0
      %v561 = vmax.f32 %v510, 0.0
      %v562 = vmax.f32 %v513, 0.0
      %v563 = vmax.f32 %v515, 0.0
      %v564 = vmax.f32 %v518, 0.0
      %v565 = vmax.f32 %v520, 0.0
      %v566 = vmax.f32 %v523, 0.0
      %v567 = vmax.f32 %v525, 0.0
      %v568 = vmax.f32 %v528, 0.0
      %v569 = vmax.f32 %v530, 0.0
      %v570 = vmax.f32 %v533, 0.0
      %v571 = vmax.f32 %v535, 0.0
      %v572 = vmax.f32 %v538, 0.0
      %v573 = vmax.f32 %v540, 0.0
      %vm574 = vcmask 31744
      %575 = vst.msk [vmem:[#allocation2] sm:$0xff] %vm574, 0.0
      %576 = vst.msk [vmem:[#allocation2 + $0x8] sm:$0xff] %vm574, 0.0
      %577 = vst.msk [vmem:[#allocation2 + $0x10] sm:$0xff] %vm574, 0.0
      %vm578 = vcmask 24576
      %579 = vst.msk [vmem:[#allocation2 + $0x18] sm:$0x1] %vm578, 0.0
      %s580 = scalar_lea.vmem [#allocation2], 544
      %581 = vst.msk [vmem:[%s580] sm:$0xff] %vm574, 0.0
      %582 = vst.msk [vmem:[%s580 + $0x8] sm:$0xff] %vm574, 0.0
      %583 = vst.msk [vmem:[%s580 + $0x10] sm:$0xff] %vm574, 0.0
      %584 = vst.msk [vmem:[%s580 + $0x18] sm:$0x1] %vm578, 0.0
      %585 = vst.msk [vmem:[#allocation2 + $0x7] sm:$0x1] %vm578, 0.0
      %586 = vst.msk [vmem:[#allocation2 + $0x27] sm:$0x1] %vm578, 0.0
      %587 = vst.msk [vmem:[#allocation2 + $0x47] sm:$0x1] %vm578, 0.0
      %588 = vst.msk [vmem:[#allocation2 + $0x67] sm:$0x1] %vm578, 0.0
      %589 = vst.msk [vmem:[#allocation2 + $0x87] sm:$0x1] %vm578, 0.0
      %590 = vst.msk [vmem:[#allocation2 + $0xa7] sm:$0x1] %vm578, 0.0
      %591 = vst.msk [vmem:[#allocation2 + $0xc7] sm:$0x1] %vm578, 0.0
      %592 = vst.msk [vmem:[#allocation2 + $0xe7] sm:$0x1] %vm578, 0.0
      %593 = vst.msk [vmem:[#allocation2 + $0x107] sm:$0x1] %vm578, 0.0
      %594 = vst.msk [vmem:[#allocation2 + $0x127] sm:$0x1] %vm578, 0.0
      %595 = vst.msk [vmem:[#allocation2 + $0x147] sm:$0x1] %vm578, 0.0
      %596 = vst.msk [vmem:[#allocation2 + $0x167] sm:$0x1] %vm578, 0.0
      %597 = vst.msk [vmem:[#allocation2 + $0x187] sm:$0x1] %vm578, 0.0
      %598 = vst.msk [vmem:[#allocation2 + $0x1a7] sm:$0x1] %vm578, 0.0
      %599 = vst.msk [vmem:[#allocation2 + $0x1c7] sm:$0x1] %vm578, 0.0
      %600 = vst.msk [vmem:[#allocation2 + $0x1e7] sm:$0x1] %vm578, 0.0
      %601 = vst.msk [vmem:[#allocation2 + $0x207] sm:$0x1] %vm578, 0.0
      %602 = vst.msk [vmem:[#allocation2 + $0x227] sm:$0x1] %vm578, 0.0
      %603 = vst.msk [vmem:[#allocation2 + $0x18] sm:$0x1] %vm578, 0.0
      %604 = vst.msk [vmem:[#allocation2 + $0x38] sm:$0x1] %vm578, 0.0
      %605 = vst.msk [vmem:[#allocation2 + $0x58] sm:$0x1] %vm578, 0.0
      %606 = vst.msk [vmem:[#allocation2 + $0x78] sm:$0x1] %vm578, 0.0
      %607 = vst.msk [vmem:[#allocation2 + $0x98] sm:$0x1] %vm578, 0.0
      %608 = vst.msk [vmem:[#allocation2 + $0xb8] sm:$0x1] %vm578, 0.0
      %609 = vst.msk [vmem:[#allocation2 + $0xd8] sm:$0x1] %vm578, 0.0
      %610 = vst.msk [vmem:[#allocation2 + $0xf8] sm:$0x1] %vm578, 0.0
      %611 = vst.msk [vmem:[#allocation2 + $0x118] sm:$0x1] %vm578, 0.0
      %612 = vst.msk [vmem:[#allocation2 + $0x138] sm:$0x1] %vm578, 0.0
      %613 = vst.msk [vmem:[#allocation2 + $0x158] sm:$0x1] %vm578, 0.0
      %614 = vst.msk [vmem:[#allocation2 + $0x178] sm:$0x1] %vm578, 0.0
      %615 = vst.msk [vmem:[#allocation2 + $0x198] sm:$0x1] %vm578, 0.0
      %616 = vst.msk [vmem:[#allocation2 + $0x1b8] sm:$0x1] %vm578, 0.0
      %617 = vst.msk [vmem:[#allocation2 + $0x1d8] sm:$0x1] %vm578, 0.0
      %618 = vst.msk [vmem:[#allocation2 + $0x1f8] sm:$0x1] %vm578, 0.0
      %619 = vst.msk [vmem:[#allocation2 + $0x218] sm:$0x1] %vm578, 0.0
      %620 = vst.msk [vmem:[#allocation2 + $0x238] sm:$0x1] %vm578, 0.0
      %s621 = scalar_lea.vmem [#allocation2], 32
      %622 = vst.msk [vmem:[%s621 + $0x8] sm:$0xff] %vm574, %v542
      %623 = vst.msk [vmem:[%s621 + $0x10] sm:$0xff] %vm574, %v543
      %624 = vst.msk [vmem:[%s621 + $0x28] sm:$0xff] %vm574, %v544
      %625 = vst.msk [vmem:[%s621 + $0x30] sm:$0xff] %vm574, %v545
      %626 = vst.msk [vmem:[%s621 + $0x48] sm:$0xff] %vm574, %v546
      %627 = vst.msk [vmem:[%s621 + $0x50] sm:$0xff] %vm574, %v547
      %628 = vst.msk [vmem:[%s621 + $0x68] sm:$0xff] %vm574, %v548
      %629 = vst.msk [vmem:[%s621 + $0x70] sm:$0xff] %vm574, %v549
      %630 = vst.msk [vmem:[%s621 + $0x88] sm:$0xff] %vm574, %v550
      %631 = vst.msk [vmem:[%s621 + $0x90] sm:$0xff] %vm574, %v551
      %632 = vst.msk [vmem:[%s621 + $0xa8] sm:$0xff] %vm574, %v552
      %633 = vst.msk [vmem:[%s621 + $0xb0] sm:$0xff] %vm574, %v553
      %634 = vst.msk [vmem:[%s621 + $0xc8] sm:$0xff] %vm574, %v554
      %635 = vst.msk [vmem:[%s621 + $0xd0] sm:$0xff] %vm574, %v555
      %636 = vst.msk [vmem:[%s621 + $0xe8] sm:$0xff] %vm574, %v556
      %637 = vst.msk [vmem:[%s621 + $0xf0] sm:$0xff] %vm574, %v557
      %638 = vst.msk [vmem:[%s621 + $0x108] sm:$0xff] %vm574, %v558
      %639 = vst.msk [vmem:[%s621 + $0x110] sm:$0xff] %vm574, %v559
      %640 = vst.msk [vmem:[%s621 + $0x128] sm:$0xff] %vm574, %v560
      %641 = vst.msk [vmem:[%s621 + $0x130] sm:$0xff] %vm574, %v561
      %642 = vst.msk [vmem:[%s621 + $0x148] sm:$0xff] %vm574, %v562
      %643 = vst.msk [vmem:[%s621 + $0x150] sm:$0xff] %vm574, %v563
      %644 = vst.msk [vmem:[%s621 + $0x168] sm:$0xff] %vm574, %v564
      %645 = vst.msk [vmem:[%s621 + $0x170] sm:$0xff] %vm574, %v565
      %646 = vst.msk [vmem:[%s621 + $0x188] sm:$0xff] %vm574, %v566
      %647 = vst.msk [vmem:[%s621 + $0x190] sm:$0xff] %vm574, %v567
      %648 = vst.msk [vmem:[%s621 + $0x1a8] sm:$0xff] %vm574, %v568
      %649 = vst.msk [vmem:[%s621 + $0x1b0] sm:$0xff] %vm574, %v569
      %650 = vst.msk [vmem:[%s621 + $0x1c8] sm:$0xff] %vm574, %v570
      %651 = vst.msk [vmem:[%s621 + $0x1d0] sm:$0xff] %vm574, %v571
      %652 = vst.msk [vmem:[%s621 + $0x1e8] sm:$0xff] %vm574, %v572
      %653 = vst.msk [vmem:[%s621 + $0x1f0] sm:$0xff] %vm574, %v573
      %v654 = vld [vmem:[#allocation2] sm:$0xff]
      %v655 = vld [vmem:[#allocation2 + $0x8] sm:$0xff]
      %v656 = vld [vmem:[#allocation2 + $0x10] sm:$0xff]
      %v657 = vld [vmem:[#allocation2 + $0x18] sm:$0x1]
      %v658 = vld [vmem:[#allocation2 + $0x20] sm:$0xff]
      %v659 = vld [vmem:[#allocation2 + $0x28] sm:$0xff]
      %v660 = vld [vmem:[#allocation2 + $0x30] sm:$0xff]
      %v661 = vld [vmem:[#allocation2 + $0x38] sm:$0x1]
      %v662 = vld [vmem:[#allocation2 + $0x40] sm:$0xff]
      %v663 = vld [vmem:[#allocation2 + $0x48] sm:$0xff]
      %v664 = vld [vmem:[#allocation2 + $0x50] sm:$0xff]
      %v665 = vld [vmem:[#allocation2 + $0x58] sm:$0x1]
      %v666 = vld [vmem:[#allocation2 + $0x60] sm:$0xff]
      %v667 = vld [vmem:[#allocation2 + $0x68] sm:$0xff]
      %v668 = vld [vmem:[#allocation2 + $0x70] sm:$0xff]
      %v669 = vld [vmem:[#allocation2 + $0x78] sm:$0x1]
      %v670 = vld [vmem:[#allocation2 + $0x80] sm:$0xff]
      %v671 = vld [vmem:[#allocation2 + $0x88] sm:$0xff]
      %v672 = vld [vmem:[#allocation2 + $0x90] sm:$0xff]
      %v673 = vld [vmem:[#allocation2 + $0x98] sm:$0x1]
      %v674 = vld [vmem:[#allocation2 + $0xa0] sm:$0xff]
      %v675 = vld [vmem:[#allocation2 + $0xa8] sm:$0xff]
      %v676 = vld [vmem:[#allocation2 + $0xb0] sm:$0xff]
      %v677 = vld [vmem:[#allocation2 + $0xb8] sm:$0x1]
      %v678 = vld [vmem:[#allocation2 + $0xc0] sm:$0xff]
      %v679 = vld [vmem:[#allocation2 + $0xc8] sm:$0xff]
      %v680 = vld [vmem:[#allocation2 + $0xd0] sm:$0xff]
      %v681 = vld [vmem:[#allocation2 + $0xd8] sm:$0x1]
      %v682 = vld [vmem:[#allocation2 + $0xe0] sm:$0xff]
      %v683 = vld [vmem:[#allocation2 + $0xe8] sm:$0xff]
      %v684 = vld [vmem:[#allocation2 + $0xf0] sm:$0xff]
      %v685 = vld [vmem:[#allocation2 + $0xf8] sm:$0x1]
      %v686 = vld [vmem:[#allocation2 + $0x100] sm:$0xff]
      %v687 = vld [vmem:[#allocation2 + $0x108] sm:$0xff]
      %v688 = vld [vmem:[#allocation2 + $0x110] sm:$0xff]
      %v689 = vld [vmem:[#allocation2 + $0x118] sm:$0x1]
      %v690 = vld [vmem:[#allocation2 + $0x120] sm:$0xff]
      %v691 = vld [vmem:[#allocation2 + $0x128] sm:$0xff]
      %v692 = vld [vmem:[#allocation2 + $0x130] sm:$0xff]
      %v693 = vld [vmem:[#allocation2 + $0x138] sm:$0x1]
      %v694 = vld [vmem:[#allocation2 + $0x140] sm:$0xff]
      %v695 = vld [vmem:[#allocation2 + $0x148] sm:$0xff]
      %v696 = vld [vmem:[#allocation2 + $0x150] sm:$0xff]
      %v697 = vld [vmem:[#allocation2 + $0x158] sm:$0x1]
      %v698 = vld [vmem:[#allocation2 + $0x160] sm:$0xff]
      %v699 = vld [vmem:[#allocation2 + $0x168] sm:$0xff]
      %v700 = vld [vmem:[#allocation2 + $0x170] sm:$0xff]
      %v701 = vld [vmem:[#allocation2 + $0x178] sm:$0x1]
      %v702 = vld [vmem:[#allocation2 + $0x180] sm:$0xff]
      %v703 = vld [vmem:[#allocation2 + $0x188] sm:$0xff]
      %v704 = vld [vmem:[#allocation2 + $0x190] sm:$0xff]
      %v705 = vld [vmem:[#allocation2 + $0x198] sm:$0x1]
      %v706 = vld [vmem:[#allocation2 + $0x1a0] sm:$0xff]
      %v707 = vld [vmem:[#allocation2 + $0x1a8] sm:$0xff]
      %v708 = vld [vmem:[#allocation2 + $0x1b0] sm:$0xff]
      %v709 = vld [vmem:[#allocation2 + $0x1b8] sm:$0x1]
      %v710 = vld [vmem:[#allocation2 + $0x1c0] sm:$0xff]
      %v711 = vld [vmem:[#allocation2 + $0x1c8] sm:$0xff]
      %v712 = vld [vmem:[#allocation2 + $0x1d0] sm:$0xff]
      %v713 = vld [vmem:[#allocation2 + $0x1d8] sm:$0x1]
      %v714 = vld [vmem:[#allocation2 + $0x1e0] sm:$0xff]
      %v715 = vld [vmem:[#allocation2 + $0x1e8] sm:$0xff]
      %v716 = vld [vmem:[#allocation2 + $0x1f0] sm:$0xff]
      %v717 = vld [vmem:[#allocation2 + $0x1f8] sm:$0x1]
      %v718 = vld [vmem:[#allocation2 + $0x200] sm:$0xff]
      %v719 = vld [vmem:[#allocation2 + $0x208] sm:$0xff]
      %v720 = vld [vmem:[#allocation2 + $0x210] sm:$0xff]
      %v721 = vld [vmem:[#allocation2 + $0x218] sm:$0x1]
      %v722 = vld [vmem:[#allocation2 + $0x220] sm:$0xff]
      %v723 = vld [vmem:[#allocation2 + $0x228] sm:$0xff]
      %v724 = vld [vmem:[#allocation2 + $0x230] sm:$0xff]
      %v725 = vld [vmem:[#allocation2 + $0x238] sm:$0x1]
      %vm774 = vcmask 1040384
      %v775 = vrot.slane %v654, 7
      %v776 = vrot.slane %v655, 7
      %v777 = vsel %vm774, %v775, %v776
      %v778 = vrot.slane %v656, 7
      %v779 = vsel %vm774, %v776, %v778
      %v780 = vrot.slane %v658, 7
      %v781 = vrot.slane %v659, 7
      %v782 = vsel %vm774, %v780, %v781
      %v783 = vrot.slane %v660, 7
      %v784 = vsel %vm774, %v781, %v783
      %v785 = vrot.slane %v662, 7
      %v786 = vrot.slane %v663, 7
      %v787 = vsel %vm774, %v785, %v786
      %v788 = vrot.slane %v664, 7
      %v789 = vsel %vm774, %v786, %v788
      %v790 = vrot.slane %v666, 7
      %v791 = vrot.slane %v667, 7
      %v792 = vsel %vm774, %v790, %v791
      %v793 = vrot.slane %v668, 7
      %v794 = vsel %vm774, %v791, %v793
      %v795 = vrot.slane %v670, 7
      %v796 = vrot.slane %v671, 7
      %v797 = vsel %vm774, %v795, %v796
      %v798 = vrot.slane %v672, 7
      %v799 = vsel %vm774, %v796, %v798
      %v800 = vrot.slane %v674, 7
      %v801 = vrot.slane %v675, 7
      %v802 = vsel %vm774, %v800, %v801
      %v803 = vrot.slane %v676, 7
      %v804 = vsel %vm774, %v801, %v803
      %v805 = vrot.slane %v678, 7
      %v806 = vrot.slane %v679, 7
      %v807 = vsel %vm774, %v805, %v806
      %v808 = vrot.slane %v680, 7
      %v809 = vsel %vm774, %v806, %v808
      %v810 = vrot.slane %v682, 7
      %v811 = vrot.slane %v683, 7
      %v812 = vsel %vm774, %v810, %v811
      %v813 = vrot.slane %v684, 7
      %v814 = vsel %vm774, %v811, %v813
      %v815 = vrot.slane %v686, 7
      %v816 = vrot.slane %v687, 7
      %v817 = vsel %vm774, %v815, %v816
      %v818 = vrot.slane %v688, 7
      %v819 = vsel %vm774, %v816, %v818
      %v820 = vrot.slane %v690, 7
      %v821 = vrot.slane %v691, 7
      %v822 = vsel %vm774, %v820, %v821
      %v823 = vrot.slane %v692, 7
      %v824 = vsel %vm774, %v821, %v823
      %v825 = vrot.slane %v694, 7
      %v826 = vrot.slane %v695, 7
      %v827 = vsel %vm774, %v825, %v826
      %v828 = vrot.slane %v696, 7
      %v829 = vsel %vm774, %v826, %v828
      %v830 = vrot.slane %v698, 7
      %v831 = vrot.slane %v699, 7
      %v832 = vsel %vm774, %v830, %v831
      %v833 = vrot.slane %v700, 7
      %v834 = vsel %vm774, %v831, %v833
      %v835 = vrot.slane %v702, 7
      %v836 = vrot.slane %v703, 7
      %v837 = vsel %vm774, %v835, %v836
      %v838 = vrot.slane %v704, 7
      %v839 = vsel %vm774, %v836, %v838
      %v840 = vrot.slane %v706, 7
      %v841 = vrot.slane %v707, 7
      %v842 = vsel %vm774, %v840, %v841
      %v843 = vrot.slane %v708, 7
      %v844 = vsel %vm774, %v841, %v843
      %v845 = vrot.slane %v710, 7
      %v846 = vrot.slane %v711, 7
      %v847 = vsel %vm774, %v845, %v846
      %v848 = vrot.slane %v712, 7
      %v849 = vsel %vm774, %v846, %v848
      %v850 = vrot.slane %v714, 7
      %v851 = vrot.slane %v715, 7
      %v852 = vsel %vm774, %v850, %v851
      %v853 = vrot.slane %v716, 7
      %v854 = vsel %vm774, %v851, %v853
      %v887 = vpack.c.bf16 %v777, %v777
      %v888 = vpack.c.bf16 %v779, %v779
      %v889 = vpack.c.bf16 %v782, %v782
      %v890 = vpack.c.bf16 %v784, %v784
      %v891 = vpack.c.bf16 %v787, %v787
      %v892 = vpack.c.bf16 %v789, %v789
      %v893 = vpack.c.bf16 %v792, %v792
      %v894 = vpack.c.bf16 %v794, %v794
      %v895 = vpack.c.bf16 %v797, %v797
      %v896 = vpack.c.bf16 %v799, %v799
      %v897 = vpack.c.bf16 %v802, %v802
      %v898 = vpack.c.bf16 %v804, %v804
      %v899 = vpack.c.bf16 %v807, %v807
      %v900 = vpack.c.bf16 %v809, %v809
      %v901 = vpack.c.bf16 %v812, %v812
      %v902 = vpack.c.bf16 %v814, %v814
      %v903 = vpack.c.bf16 %v817, %v817
      %v904 = vpack.c.bf16 %v819, %v819
      %v905 = vpack.c.bf16 %v822, %v822
      %v906 = vpack.c.bf16 %v824, %v824
      %v907 = vpack.c.bf16 %v827, %v827
      %v908 = vpack.c.bf16 %v829, %v829
      %v909 = vpack.c.bf16 %v832, %v832
      %v910 = vpack.c.bf16 %v834, %v834
      %v911 = vpack.c.bf16 %v837, %v837
      %v912 = vpack.c.bf16 %v839, %v839
      %v913 = vpack.c.bf16 %v842, %v842
      %v914 = vpack.c.bf16 %v844, %v844
      %v915 = vpack.c.bf16 %v847, %v847
      %v916 = vpack.c.bf16 %v849, %v849
      %v917 = vpack.c.bf16 %v852, %v852
      %v918 = vpack.c.bf16 %v854, %v854
      %vm919 = vcmask 27648
      %920 = vst.msk [vmem:[#allocation3] sm:$0xf] %vm919, %v887
      %921 = vst.msk [vmem:[#allocation3 + $0x4] sm:$0xf] %vm919, %v888
      %922 = vst.msk [vmem:[#allocation3 + $0x8] sm:$0xf] %vm919, %v889
      %923 = vst.msk [vmem:[#allocation3 + $0xc] sm:$0xf] %vm919, %v890
      %924 = vst.msk [vmem:[#allocation3 + $0x10] sm:$0xf] %vm919, %v891
      %925 = vst.msk [vmem:[#allocation3 + $0x14] sm:$0xf] %vm919, %v892
      %926 = vst.msk [vmem:[#allocation3 + $0x18] sm:$0xf] %vm919, %v893
      %927 = vst.msk [vmem:[#allocation3 + $0x1c] sm:$0xf] %vm919, %v894
      %928 = vst.msk [vmem:[#allocation3 + $0x20] sm:$0xf] %vm919, %v895
      %929 = vst.msk [vmem:[#allocation3 + $0x24] sm:$0xf] %vm919, %v896
      %930 = vst.msk [vmem:[#allocation3 + $0x28] sm:$0xf] %vm919, %v897
      %931 = vst.msk [vmem:[#allocation3 + $0x2c] sm:$0xf] %vm919, %v898
      %932 = vst.msk [vmem:[#allocation3 + $0x30] sm:$0xf] %vm919, %v899
      %933 = vst.msk [vmem:[#allocation3 + $0x34] sm:$0xf] %vm919, %v900
      %934 = vst.msk [vmem:[#allocation3 + $0x38] sm:$0xf] %vm919, %v901
      %935 = vst.msk [vmem:[#allocation3 + $0x3c] sm:$0xf] %vm919, %v902
      %936 = vst.msk [vmem:[#allocation3 + $0x40] sm:$0xf] %vm919, %v903
      %937 = vst.msk [vmem:[#allocation3 + $0x44] sm:$0xf] %vm919, %v904
      %938 = vst.msk [vmem:[#allocation3 + $0x48] sm:$0xf] %vm919, %v905
      %939 = vst.msk [vmem:[#allocation3 + $0x4c] sm:$0xf] %vm919, %v906
      %940 = vst.msk [vmem:[#allocation3 + $0x50] sm:$0xf] %vm919, %v907
      %941 = vst.msk [vmem:[#allocation3 + $0x54] sm:$0xf] %vm919, %v908
      %942 = vst.msk [vmem:[#allocation3 + $0x58] sm:$0xf] %vm919, %v909
      %943 = vst.msk [vmem:[#allocation3 + $0x5c] sm:$0xf] %vm919, %v910
      %944 = vst.msk [vmem:[#allocation3 + $0x60] sm:$0xf] %vm919, %v911
      %945 = vst.msk [vmem:[#allocation3 + $0x64] sm:$0xf] %vm919, %v912
      %946 = vst.msk [vmem:[#allocation3 + $0x68] sm:$0xf] %vm919, %v913
      %947 = vst.msk [vmem:[#allocation3 + $0x6c] sm:$0xf] %vm919, %v914
      %948 = vst.msk [vmem:[#allocation3 + $0x70] sm:$0xf] %vm919, %v915
      %949 = vst.msk [vmem:[#allocation3 + $0x74] sm:$0xf] %vm919, %v916
      %950 = vst.msk [vmem:[#allocation3 + $0x78] sm:$0xf] %vm919, %v917
      %951 = vst.msk [vmem:[#allocation3 + $0x7c] sm:$0xf] %vm919, %v918
      %v952 = vpack.c.bf16 %v655, %v655
      %v953 = vpack.c.bf16 %v656, %v656
      %v954 = vpack.c.bf16 %v659, %v659
      %v955 = vpack.c.bf16 %v660, %v660
      %v956 = vpack.c.bf16 %v663, %v663
      %v957 = vpack.c.bf16 %v664, %v664
      %v958 = vpack.c.bf16 %v667, %v667
      %v959 = vpack.c.bf16 %v668, %v668
      %v960 = vpack.c.bf16 %v671, %v671
      %v961 = vpack.c.bf16 %v672, %v672
      %v962 = vpack.c.bf16 %v675, %v675
      %v963 = vpack.c.bf16 %v676, %v676
      %v964 = vpack.c.bf16 %v679, %v679
      %v965 = vpack.c.bf16 %v680, %v680
      %v966 = vpack.c.bf16 %v683, %v683
      %v967 = vpack.c.bf16 %v684, %v684
      %v968 = vpack.c.bf16 %v687, %v687
      %v969 = vpack.c.bf16 %v688, %v688
      %v970 = vpack.c.bf16 %v691, %v691
      %v971 = vpack.c.bf16 %v692, %v692
      %v972 = vpack.c.bf16 %v695, %v695
      %v973 = vpack.c.bf16 %v696, %v696
      %v974 = vpack.c.bf16 %v699, %v699
      %v975 = vpack.c.bf16 %v700, %v700
      %v976 = vpack.c.bf16 %v703, %v703
      %v977 = vpack.c.bf16 %v704, %v704
      %v978 = vpack.c.bf16 %v707, %v707
      %v979 = vpack.c.bf16 %v708, %v708
      %v980 = vpack.c.bf16 %v711, %v711
      %v981 = vpack.c.bf16 %v712, %v712
      %v982 = vpack.c.bf16 %v715, %v715
      %v983 = vpack.c.bf16 %v716, %v716
      %1016 = vrot.lane.b32.xlu0 %v952, 4
      %v1017 = vpop.permute.xlu0 %1016
      %1018 = vrot.lane.b32.xlu0 %v953, 4
      %v1019 = vpop.permute.xlu0 %1018
      %1020 = vrot.lane.b32.xlu0 %v954, 4
      %v1021 = vpop.permute.xlu0 %1020
      %1022 = vrot.lane.b32.xlu0 %v955, 4
      %v1023 = vpop.permute.xlu0 %1022
      %1024 = vrot.lane.b32.xlu0 %v956, 4
      %v1025 = vpop.permute.xlu0 %1024
      %1026 = vrot.lane.b32.xlu0 %v957, 4
      %v1027 = vpop.permute.xlu0 %1026
      %1028 = vrot.lane.b32.xlu0 %v958, 4
      %v1029 = vpop.permute.xlu0 %1028
      %1030 = vrot.lane.b32.xlu0 %v959, 4
      %v1031 = vpop.permute.xlu0 %1030
      %1032 = vrot.lane.b32.xlu0 %v960, 4
      %v1033 = vpop.permute.xlu0 %1032
      %1034 = vrot.lane.b32.xlu0 %v961, 4
      %v1035 = vpop.permute.xlu0 %1034
      %1036 = vrot.lane.b32.xlu0 %v962, 4
      %v1037 = vpop.permute.xlu0 %1036
      %1038 = vrot.lane.b32.xlu0 %v963, 4
      %v1039 = vpop.permute.xlu0 %1038
      %1040 = vrot.lane.b32.xlu0 %v964, 4
      %v1041 = vpop.permute.xlu0 %1040
      %1042 = vrot.lane.b32.xlu0 %v965, 4
      %v1043 = vpop.permute.xlu0 %1042
      %1044 = vrot.lane.b32.xlu0 %v966, 4
      %v1045 = vpop.permute.xlu0 %1044
      %1046 = vrot.lane.b32.xlu0 %v967, 4
      %v1047 = vpop.permute.xlu0 %1046
      %1048 = vrot.lane.b32.xlu0 %v968, 4
      %v1049 = vpop.permute.xlu0 %1048
      %1050 = vrot.lane.b32.xlu0 %v969, 4
      %v1051 = vpop.permute.xlu0 %1050
      %1052 = vrot.lane.b32.xlu0 %v970, 4
      %v1053 = vpop.permute.xlu0 %1052
      %1054 = vrot.lane.b32.xlu0 %v971, 4
      %v1055 = vpop.permute.xlu0 %1054
      %1056 = vrot.lane.b32.xlu0 %v972, 4
      %v1057 = vpop.permute.xlu0 %1056
      %1058 = vrot.lane.b32.xlu0 %v973, 4
      %v1059 = vpop.permute.xlu0 %1058
      %1060 = vrot.lane.b32.xlu0 %v974, 4
      %v1061 = vpop.permute.xlu0 %1060
      %1062 = vrot.lane.b32.xlu0 %v975, 4
      %v1063 = vpop.permute.xlu0 %1062
      %1064 = vrot.lane.b32.xlu0 %v976, 4
      %v1065 = vpop.permute.xlu0 %1064
      %1066 = vrot.lane.b32.xlu0 %v977, 4
      %v1067 = vpop.permute.xlu0 %1066
      %1068 = vrot.lane.b32.xlu0 %v978, 4
      %v1069 = vpop.permute.xlu0 %1068
      %1070 = vrot.lane.b32.xlu0 %v979, 4
      %v1071 = vpop.permute.xlu0 %1070
      %1072 = vrot.lane.b32.xlu0 %v980, 4
      %v1073 = vpop.permute.xlu0 %1072
      %1074 = vrot.lane.b32.xlu0 %v981, 4
      %v1075 = vpop.permute.xlu0 %1074
      %1076 = vrot.lane.b32.xlu0 %v982, 4
      %v1077 = vpop.permute.xlu0 %1076
      %1078 = vrot.lane.b32.xlu0 %v983, 4
      %v1079 = vpop.permute.xlu0 %1078
      %vm1112 = vcmask 60448
      %1113 = vst.msk [vmem:[#allocation3] sm:$0xf] %vm1112, %v1017
      %1114 = vst.msk [vmem:[#allocation3 + $0x4] sm:$0xf] %vm1112, %v1019
      %1115 = vst.msk [vmem:[#allocation3 + $0x8] sm:$0xf] %vm1112, %v1021
      %1116 = vst.msk [vmem:[#allocation3 + $0xc] sm:$0xf] %vm1112, %v1023
      %1117 = vst.msk [vmem:[#allocation3 + $0x10] sm:$0xf] %vm1112, %v1025
      %1118 = vst.msk [vmem:[#allocation3 + $0x14] sm:$0xf] %vm1112, %v1027
      %1119 = vst.msk [vmem:[#allocation3 + $0x18] sm:$0xf] %vm1112, %v1029
      %1120 = vst.msk [vmem:[#allocation3 + $0x1c] sm:$0xf] %vm1112, %v1031
      %1121 = vst.msk [vmem:[#allocation3 + $0x20] sm:$0xf] %vm1112, %v1033
      %1122 = vst.msk [vmem:[#allocation3 + $0x24] sm:$0xf] %vm1112, %v1035
      %1123 = vst.msk [vmem:[#allocation3 + $0x28] sm:$0xf] %vm1112, %v1037
      %1124 = vst.msk [vmem:[#allocation3 + $0x2c] sm:$0xf] %vm1112, %v1039
      %1125 = vst.msk [vmem:[#allocation3 + $0x30] sm:$0xf] %vm1112, %v1041
      %1126 = vst.msk [vmem:[#allocation3 + $0x34] sm:$0xf] %vm1112, %v1043
      %1127 = vst.msk [vmem:[#allocation3 + $0x38] sm:$0xf] %vm1112, %v1045
      %1128 = vst.msk [vmem:[#allocation3 + $0x3c] sm:$0xf] %vm1112, %v1047
      %1129 = vst.msk [vmem:[#allocation3 + $0x40] sm:$0xf] %vm1112, %v1049
      %1130 = vst.msk [vmem:[#allocation3 + $0x44] sm:$0xf] %vm1112, %v1051
      %1131 = vst.msk [vmem:[#allocation3 + $0x48] sm:$0xf] %vm1112, %v1053
      %1132 = vst.msk [vmem:[#allocation3 + $0x4c] sm:$0xf] %vm1112, %v1055
      %1133 = vst.msk [vmem:[#allocation3 + $0x50] sm:$0xf] %vm1112, %v1057
      %1134 = vst.msk [vmem:[#allocation3 + $0x54] sm:$0xf] %vm1112, %v1059
      %1135 = vst.msk [vmem:[#allocation3 + $0x58] sm:$0xf] %vm1112, %v1061
      %1136 = vst.msk [vmem:[#allocation3 + $0x5c] sm:$0xf] %vm1112, %v1063
      %1137 = vst.msk [vmem:[#allocation3 + $0x60] sm:$0xf] %vm1112, %v1065
      %1138 = vst.msk [vmem:[#allocation3 + $0x64] sm:$0xf] %vm1112, %v1067
      %1139 = vst.msk [vmem:[#allocation3 + $0x68] sm:$0xf] %vm1112, %v1069
      %1140 = vst.msk [vmem:[#allocation3 + $0x6c] sm:$0xf] %vm1112, %v1071
      %1141 = vst.msk [vmem:[#allocation3 + $0x70] sm:$0xf] %vm1112, %v1073
      %1142 = vst.msk [vmem:[#allocation3 + $0x74] sm:$0xf] %vm1112, %v1075
      %1143 = vst.msk [vmem:[#allocation3 + $0x78] sm:$0xf] %vm1112, %v1077
      %1144 = vst.msk [vmem:[#allocation3 + $0x7c] sm:$0xf] %vm1112, %v1079
      %vm1161 = vcmask 1046528
      %v1162 = vrot.slane %v655, 1
      %v1163 = vrot.slane %v656, 1
      %v1164 = vsel %vm1161, %v1162, %v1163
      %v1165 = vrot.slane %v657, 1
      %v1166 = vsel %vm1161, %v1163, %v1165
      %v1167 = vrot.slane %v659, 1
      %v1168 = vrot.slane %v660, 1
      %v1169 = vsel %vm1161, %v1167, %v1168
      %v1170 = vrot.slane %v661, 1
      %v1171 = vsel %vm1161, %v1168, %v1170
      %v1172 = vrot.slane %v663, 1
      %v1173 = vrot.slane %v664, 1
      %v1174 = vsel %vm1161, %v1172, %v1173
      %v1175 = vrot.slane %v665, 1
      %v1176 = vsel %vm1161, %v1173, %v1175
      %v1177 = vrot.slane %v667, 1
      %v1178 = vrot.slane %v668, 1
      %v1179 = vsel %vm1161, %v1177, %v1178
      %v1180 = vrot.slane %v669, 1
      %v1181 = vsel %vm1161, %v1178, %v1180
      %v1182 = vrot.slane %v671, 1
      %v1183 = vrot.slane %v672, 1
      %v1184 = vsel %vm1161, %v1182, %v1183
      %v1185 = vrot.slane %v673, 1
      %v1186 = vsel %vm1161, %v1183, %v1185
      %v1187 = vrot.slane %v675, 1
      %v1188 = vrot.slane %v676, 1
      %v1189 = vsel %vm1161, %v1187, %v1188
      %v1190 = vrot.slane %v677, 1
      %v1191 = vsel %vm1161, %v1188, %v1190
      %v1192 = vrot.slane %v679, 1
      %v1193 = vrot.slane %v680, 1
      %v1194 = vsel %vm1161, %v1192, %v1193
      %v1195 = vrot.slane %v681, 1
      %v1196 = vsel %vm1161, %v1193, %v1195
      %v1197 = vrot.slane %v683, 1
      %v1198 = vrot.slane %v684, 1
      %v1199 = vsel %vm1161, %v1197, %v1198
      %v1200 = vrot.slane %v685, 1
      %v1201 = vsel %vm1161, %v1198, %v1200
      %v1202 = vrot.slane %v687, 1
      %v1203 = vrot.slane %v688, 1
      %v1204 = vsel %vm1161, %v1202, %v1203
      %v1205 = vrot.slane %v689, 1
      %v1206 = vsel %vm1161, %v1203, %v1205
      %v1207 = vrot.slane %v691, 1
      %v1208 = vrot.slane %v692, 1
      %v1209 = vsel %vm1161, %v1207, %v1208
      %v1210 = vrot.slane %v693, 1
      %v1211 = vsel %vm1161, %v1208, %v1210
      %v1212 = vrot.slane %v695, 1
      %v1213 = vrot.slane %v696, 1
      %v1214 = vsel %vm1161, %v1212, %v1213
      %v1215 = vrot.slane %v697, 1
      %v1216 = vsel %vm1161, %v1213, %v1215
      %v1217 = vrot.slane %v699, 1
      %v1218 = vrot.slane %v700, 1
      %v1219 = vsel %vm1161, %v1217, %v1218
      %v1220 = vrot.slane %v701, 1
      %v1221 = vsel %vm1161, %v1218, %v1220
      %v1222 = vrot.slane %v703, 1
      %v1223 = vrot.slane %v704, 1
      %v1224 = vsel %vm1161, %v1222, %v1223
      %v1225 = vrot.slane %v705, 1
      %v1226 = vsel %vm1161, %v1223, %v1225
      %v1227 = vrot.slane %v707, 1
      %v1228 = vrot.slane %v708, 1
      %v1229 = vsel %vm1161, %v1227, %v1228
      %v1230 = vrot.slane %v709, 1
      %v1231 = vsel %vm1161, %v1228, %v1230
      %v1232 = vrot.slane %v711, 1
      %v1233 = vrot.slane %v712, 1
      %v1234 = vsel %vm1161, %v1232, %v1233
      %v1235 = vrot.slane %v713, 1
      %v1236 = vsel %vm1161, %v1233, %v1235
      %v1237 = vrot.slane %v715, 1
      %v1238 = vrot.slane %v716, 1
      %v1239 = vsel %vm1161, %v1237, %v1238
      %v1240 = vrot.slane %v717, 1
      %v1241 = vsel %vm1161, %v1238, %v1240
      %v1274 = vpack.c.bf16 %v1164, %v1164
      %v1275 = vpack.c.bf16 %v1166, %v1166
      %v1276 = vpack.c.bf16 %v1169, %v1169
      %v1277 = vpack.c.bf16 %v1171, %v1171
      %v1278 = vpack.c.bf16 %v1174, %v1174
      %v1279 = vpack.c.bf16 %v1176, %v1176
      %v1280 = vpack.c.bf16 %v1179, %v1179
      %v1281 = vpack.c.bf16 %v1181, %v1181
      %v1282 = vpack.c.bf16 %v1184, %v1184
      %v1283 = vpack.c.bf16 %v1186, %v1186
      %v1284 = vpack.c.bf16 %v1189, %v1189
      %v1285 = vpack.c.bf16 %v1191, %v1191
      %v1286 = vpack.c.bf16 %v1194, %v1194
      %v1287 = vpack.c.bf16 %v1196, %v1196
      %v1288 = vpack.c.bf16 %v1199, %v1199
      %v1289 = vpack.c.bf16 %v1201, %v1201
      %v1290 = vpack.c.bf16 %v1204, %v1204
      %v1291 = vpack.c.bf16 %v1206, %v1206
      %v1292 = vpack.c.bf16 %v1209, %v1209
      %v1293 = vpack.c.bf16 %v1211, %v1211
      %v1294 = vpack.c.bf16 %v1214, %v1214
      %v1295 = vpack.c.bf16 %v1216, %v1216
      %v1296 = vpack.c.bf16 %v1219, %v1219
      %v1297 = vpack.c.bf16 %v1221, %v1221
      %v1298 = vpack.c.bf16 %v1224, %v1224
      %v1299 = vpack.c.bf16 %v1226, %v1226
      %v1300 = vpack.c.bf16 %v1229, %v1229
      %v1301 = vpack.c.bf16 %v1231, %v1231
      %v1302 = vpack.c.bf16 %v1234, %v1234
      %v1303 = vpack.c.bf16 %v1236, %v1236
      %v1304 = vpack.c.bf16 %v1239, %v1239
      %v1305 = vpack.c.bf16 %v1241, %v1241
      %1338 = vrot.lane.b32.xlu0 %v1274, 8
      %v1339 = vpop.permute.xlu0 %1338
      %1340 = vrot.lane.b32.xlu0 %v1275, 8
      %v1341 = vpop.permute.xlu0 %1340
      %1342 = vrot.lane.b32.xlu0 %v1276, 8
      %v1343 = vpop.permute.xlu0 %1342
      %1344 = vrot.lane.b32.xlu0 %v1277, 8
      %v1345 = vpop.permute.xlu0 %1344
      %1346 = vrot.lane.b32.xlu0 %v1278, 8
      %v1347 = vpop.permute.xlu0 %1346
      %1348 = vrot.lane.b32.xlu0 %v1279, 8
      %v1349 = vpop.permute.xlu0 %1348
      %1350 = vrot.lane.b32.xlu0 %v1280, 8
      %v1351 = vpop.permute.xlu0 %1350
      %1352 = vrot.lane.b32.xlu0 %v1281, 8
      %v1353 = vpop.permute.xlu0 %1352
      %1354 = vrot.lane.b32.xlu0 %v1282, 8
      %v1355 = vpop.permute.xlu0 %1354
      %1356 = vrot.lane.b32.xlu0 %v1283, 8
      %v1357 = vpop.permute.xlu0 %1356
      %1358 = vrot.lane.b32.xlu0 %v1284, 8
      %v1359 = vpop.permute.xlu0 %1358
      %1360 = vrot.lane.b32.xlu0 %v1285, 8
      %v1361 = vpop.permute.xlu0 %1360
      %1362 = vrot.lane.b32.xlu0 %v1286, 8
      %v1363 = vpop.permute.xlu0 %1362
      %1364 = vrot.lane.b32.xlu0 %v1287, 8
      %v1365 = vpop.permute.xlu0 %1364
      %1366 = vrot.lane.b32.xlu0 %v1288, 8
      %v1367 = vpop.permute.xlu0 %1366
      %1368 = vrot.lane.b32.xlu0 %v1289, 8
      %v1369 = vpop.permute.xlu0 %1368
      %1370 = vrot.lane.b32.xlu0 %v1290, 8
      %v1371 = vpop.permute.xlu0 %1370
      %1372 = vrot.lane.b32.xlu0 %v1291, 8
      %v1373 = vpop.permute.xlu0 %1372
      %1374 = vrot.lane.b32.xlu0 %v1292, 8
      %v1375 = vpop.permute.xlu0 %1374
      %1376 = vrot.lane.b32.xlu0 %v1293, 8
      %v1377 = vpop.permute.xlu0 %1376
      %1378 = vrot.lane.b32.xlu0 %v1294, 8
      %v1379 = vpop.permute.xlu0 %1378
      %1380 = vrot.lane.b32.xlu0 %v1295, 8
      %v1381 = vpop.permute.xlu0 %1380
      %1382 = vrot.lane.b32.xlu0 %v1296, 8
      %v1383 = vpop.permute.xlu0 %1382
      %1384 = vrot.lane.b32.xlu0 %v1297, 8
      %v1385 = vpop.permute.xlu0 %1384
      %1386 = vrot.lane.b32.xlu0 %v1298, 8
      %v1387 = vpop.permute.xlu0 %1386
      %1388 = vrot.lane.b32.xlu0 %v1299, 8
      %v1389 = vpop.permute.xlu0 %1388
      %1390 = vrot.lane.b32.xlu0 %v1300, 8
      %v1391 = vpop.permute.xlu0 %1390
      %1392 = vrot.lane.b32.xlu0 %v1301, 8
      %v1393 = vpop.permute.xlu0 %1392
      %1394 = vrot.lane.b32.xlu0 %v1302, 8
      %v1395 = vpop.permute.xlu0 %1394
      %1396 = vrot.lane.b32.xlu0 %v1303, 8
      %v1397 = vpop.permute.xlu0 %1396
      %1398 = vrot.lane.b32.xlu0 %v1304, 8
      %v1399 = vpop.permute.xlu0 %1398
      %1400 = vrot.lane.b32.xlu0 %v1305, 8
      %v1401 = vpop.permute.xlu0 %1400
      %vm1434 = vcmask 93248
      %1435 = vst.msk [vmem:[#allocation3] sm:$0xf] %vm1434, %v1339
      %1436 = vst.msk [vmem:[#allocation3 + $0x4] sm:$0xf] %vm1434, %v1341
      %1437 = vst.msk [vmem:[#allocation3 + $0x8] sm:$0xf] %vm1434, %v1343
      %1438 = vst.msk [vmem:[#allocation3 + $0xc] sm:$0xf] %vm1434, %v1345
      %1439 = vst.msk [vmem:[#allocation3 + $0x10] sm:$0xf] %vm1434, %v1347
      %1440 = vst.msk [vmem:[#allocation3 + $0x14] sm:$0xf] %vm1434, %v1349
      %1441 = vst.msk [vmem:[#allocation3 + $0x18] sm:$0xf] %vm1434, %v1351
      %1442 = vst.msk [vmem:[#allocation3 + $0x1c] sm:$0xf] %vm1434, %v1353
      %1443 = vst.msk [vmem:[#allocation3 + $0x20] sm:$0xf] %vm1434, %v1355
      %1444 = vst.msk [vmem:[#allocation3 + $0x24] sm:$0xf] %vm1434, %v1357
      %1445 = vst.msk [vmem:[#allocation3 + $0x28] sm:$0xf] %vm1434, %v1359
      %1446 = vst.msk [vmem:[#allocation3 + $0x2c] sm:$0xf] %vm1434, %v1361
      %1447 = vst.msk [vmem:[#allocation3 + $0x30] sm:$0xf] %vm1434, %v1363
      %1448 = vst.msk [vmem:[#allocation3 + $0x34] sm:$0xf] %vm1434, %v1365
      %1449 = vst.msk [vmem:[#allocation3 + $0x38] sm:$0xf] %vm1434, %v1367
      %1450 = vst.msk [vmem:[#allocation3 + $0x3c] sm:$0xf] %vm1434, %v1369
      %1451 = vst.msk [vmem:[#allocation3 + $0x40] sm:$0xf] %vm1434, %v1371
      %1452 = vst.msk [vmem:[#allocation3 + $0x44] sm:$0xf] %vm1434, %v1373
      %1453 = vst.msk [vmem:[#allocation3 + $0x48] sm:$0xf] %vm1434, %v1375
      %1454 = vst.msk [vmem:[#allocation3 + $0x4c] sm:$0xf] %vm1434, %v1377
      %1455 = vst.msk [vmem:[#allocation3 + $0x50] sm:$0xf] %vm1434, %v1379
      %1456 = vst.msk [vmem:[#allocation3 + $0x54] sm:$0xf] %vm1434, %v1381
      %1457 = vst.msk [vmem:[#allocation3 + $0x58] sm:$0xf] %vm1434, %v1383
      %1458 = vst.msk [vmem:[#allocation3 + $0x5c] sm:$0xf] %vm1434, %v1385
      %1459 = vst.msk [vmem:[#allocation3 + $0x60] sm:$0xf] %vm1434, %v1387
      %1460 = vst.msk [vmem:[#allocation3 + $0x64] sm:$0xf] %vm1434, %v1389
      %1461 = vst.msk [vmem:[#allocation3 + $0x68] sm:$0xf] %vm1434, %v1391
      %1462 = vst.msk [vmem:[#allocation3 + $0x6c] sm:$0xf] %vm1434, %v1393
      %1463 = vst.msk [vmem:[#allocation3 + $0x70] sm:$0xf] %vm1434, %v1395
      %1464 = vst.msk [vmem:[#allocation3 + $0x74] sm:$0xf] %vm1434, %v1397
      %1465 = vst.msk [vmem:[#allocation3 + $0x78] sm:$0xf] %vm1434, %v1399
      %1466 = vst.msk [vmem:[#allocation3 + $0x7c] sm:$0xf] %vm1434, %v1401
      %v1470 = vrot.slane %v718, 7
      %v1471 = vrot.slane %v719, 7
      %v1472 = vsel %vm774, %v1470, %v1471
      %v1473 = vrot.slane %v720, 7
      %v1474 = vsel %vm774, %v1471, %v1473
      %v1477 = vpack.c.bf16 %v1472, %v1472
      %v1478 = vpack.c.bf16 %v1474, %v1474
      %1511 = vrot.lane.b32.xlu0 %v889, 12
      %v1512 = vpop.permute.xlu0 %1511
      %1513 = vrot.lane.b32.xlu0 %v890, 12
      %v1514 = vpop.permute.xlu0 %1513
      %1515 = vrot.lane.b32.xlu0 %v891, 12
      %v1516 = vpop.permute.xlu0 %1515
      %1517 = vrot.lane.b32.xlu0 %v892, 12
      %v1518 = vpop.permute.xlu0 %1517
      %1519 = vrot.lane.b32.xlu0 %v893, 12
      %v1520 = vpop.permute.xlu0 %1519
      %1521 = vrot.lane.b32.xlu0 %v894, 12
      %v1522 = vpop.permute.xlu0 %1521
      %1523 = vrot.lane.b32.xlu0 %v895, 12
      %v1524 = vpop.permute.xlu0 %1523
      %1525 = vrot.lane.b32.xlu0 %v896, 12
      %v1526 = vpop.permute.xlu0 %1525
      %1527 = vrot.lane.b32.xlu0 %v897, 12
      %v1528 = vpop.permute.xlu0 %1527
      %1529 = vrot.lane.b32.xlu0 %v898, 12
      %v1530 = vpop.permute.xlu0 %1529
      %1531 = vrot.lane.b32.xlu0 %v899, 12
      %v1532 = vpop.permute.xlu0 %1531
      %1533 = vrot.lane.b32.xlu0 %v900, 12
      %v1534 = vpop.permute.xlu0 %1533
      %1535 = vrot.lane.b32.xlu0 %v901, 12
      %v1536 = vpop.permute.xlu0 %1535
      %1537 = vrot.lane.b32.xlu0 %v902, 12
      %v1538 = vpop.permute.xlu0 %1537
      %1539 = vrot.lane.b32.xlu0 %v903, 12
      %v1540 = vpop.permute.xlu0 %1539
      %1541 = vrot.lane.b32.xlu0 %v904, 12
      %v1542 = vpop.permute.xlu0 %1541
      %1543 = vrot.lane.b32.xlu0 %v905, 12
      %v1544 = vpop.permute.xlu0 %1543
      %1545 = vrot.lane.b32.xlu0 %v906, 12
      %v1546 = vpop.permute.xlu0 %1545
      %1547 = vrot.lane.b32.xlu0 %v907, 12
      %v1548 = vpop.permute.xlu0 %1547
      %1549 = vrot.lane.b32.xlu0 %v908, 12
      %v1550 = vpop.permute.xlu0 %1549
      %1551 = vrot.lane.b32.xlu0 %v909, 12
      %v1552 = vpop.permute.xlu0 %1551
      %1553 = vrot.lane.b32.xlu0 %v910, 12
      %v1554 = vpop.permute.xlu0 %1553
      %1555 = vrot.lane.b32.xlu0 %v911, 12
      %v1556 = vpop.permute.xlu0 %1555
      %1557 = vrot.lane.b32.xlu0 %v912, 12
      %v1558 = vpop.permute.xlu0 %1557
      %1559 = vrot.lane.b32.xlu0 %v913, 12
      %v1560 = vpop.permute.xlu0 %1559
      %1561 = vrot.lane.b32.xlu0 %v914, 12
      %v1562 = vpop.permute.xlu0 %1561
      %1563 = vrot.lane.b32.xlu0 %v915, 12
      %v1564 = vpop.permute.xlu0 %1563
      %1565 = vrot.lane.b32.xlu0 %v916, 12
      %v1566 = vpop.permute.xlu0 %1565
      %1567 = vrot.lane.b32.xlu0 %v917, 12
      %v1568 = vpop.permute.xlu0 %1567
      %1569 = vrot.lane.b32.xlu0 %v918, 12
      %v1570 = vpop.permute.xlu0 %1569
      %1571 = vrot.lane.b32.xlu0 %v1477, 12
      %v1572 = vpop.permute.xlu0 %1571
      %1573 = vrot.lane.b32.xlu0 %v1478, 12
      %v1574 = vpop.permute.xlu0 %1573
      %vm1607 = vcmask 126048
      %1608 = vst.msk [vmem:[#allocation3] sm:$0xf] %vm1607, %v1512
      %1609 = vst.msk [vmem:[#allocation3 + $0x4] sm:$0xf] %vm1607, %v1514
      %1610 = vst.msk [vmem:[#allocation3 + $0x8] sm:$0xf] %vm1607, %v1516
      %1611 = vst.msk [vmem:[#allocation3 + $0xc] sm:$0xf] %vm1607, %v1518
      %1612 = vst.msk [vmem:[#allocation3 + $0x10] sm:$0xf] %vm1607, %v1520
      %1613 = vst.msk [vmem:[#allocation3 + $0x14] sm:$0xf] %vm1607, %v1522
      %1614 = vst.msk [vmem:[#allocation3 + $0x18] sm:$0xf] %vm1607, %v1524
      %1615 = vst.msk [vmem:[#allocation3 + $0x1c] sm:$0xf] %vm1607, %v1526
      %1616 = vst.msk [vmem:[#allocation3 + $0x20] sm:$0xf] %vm1607, %v1528
      %1617 = vst.msk [vmem:[#allocation3 + $0x24] sm:$0xf] %vm1607, %v1530
      %1618 = vst.msk [vmem:[#allocation3 + $0x28] sm:$0xf] %vm1607, %v1532
      %1619 = vst.msk [vmem:[#allocation3 + $0x2c] sm:$0xf] %vm1607, %v1534
      %1620 = vst.msk [vmem:[#allocation3 + $0x30] sm:$0xf] %vm1607, %v1536
      %1621 = vst.msk [vmem:[#allocation3 + $0x34] sm:$0xf] %vm1607, %v1538
      %1622 = vst.msk [vmem:[#allocation3 + $0x38] sm:$0xf] %vm1607, %v1540
      %1623 = vst.msk [vmem:[#allocation3 + $0x3c] sm:$0xf] %vm1607, %v1542
      %1624 = vst.msk [vmem:[#allocation3 + $0x40] sm:$0xf] %vm1607, %v1544
      %1625 = vst.msk [vmem:[#allocation3 + $0x44] sm:$0xf] %vm1607, %v1546
      %1626 = vst.msk [vmem:[#allocation3 + $0x48] sm:$0xf] %vm1607, %v1548
      %1627 = vst.msk [vmem:[#allocation3 + $0x4c] sm:$0xf] %vm1607, %v1550
      %1628 = vst.msk [vmem:[#allocation3 + $0x50] sm:$0xf] %vm1607, %v1552
      %1629 = vst.msk [vmem:[#allocation3 + $0x54] sm:$0xf] %vm1607, %v1554
      %1630 = vst.msk [vmem:[#allocation3 + $0x58] sm:$0xf] %vm1607, %v1556
      %1631 = vst.msk [vmem:[#allocation3 + $0x5c] sm:$0xf] %vm1607, %v1558
      %1632 = vst.msk [vmem:[#allocation3 + $0x60] sm:$0xf] %vm1607, %v1560
      %1633 = vst.msk [vmem:[#allocation3 + $0x64] sm:$0xf] %vm1607, %v1562
      %1634 = vst.msk [vmem:[#allocation3 + $0x68] sm:$0xf] %vm1607, %v1564
      %1635 = vst.msk [vmem:[#allocation3 + $0x6c] sm:$0xf] %vm1607, %v1566
      %1636 = vst.msk [vmem:[#allocation3 + $0x70] sm:$0xf] %vm1607, %v1568
      %1637 = vst.msk [vmem:[#allocation3 + $0x74] sm:$0xf] %vm1607, %v1570
      %1638 = vst.msk [vmem:[#allocation3 + $0x78] sm:$0xf] %vm1607, %v1572
      %1639 = vst.msk [vmem:[#allocation3 + $0x7c] sm:$0xf] %vm1607, %v1574
      %v1640 = vpack.c.bf16 %v719, %v719
      %v1641 = vpack.c.bf16 %v720, %v720
      %1644 = vrot.lane.b32.xlu0 %v954, 16
      %v1645 = vpop.permute.xlu0 %1644
      %1646 = vrot.lane.b32.xlu0 %v955, 16
      %v1647 = vpop.permute.xlu0 %1646
      %1648 = vrot.lane.b32.xlu0 %v956, 16
      %v1649 = vpop.permute.xlu0 %1648
      %1650 = vrot.lane.b32.xlu0 %v957, 16
      %v1651 = vpop.permute.xlu0 %1650
      %1652 = vrot.lane.b32.xlu0 %v958, 16
      %v1653 = vpop.permute.xlu0 %1652
      %1654 = vrot.lane.b32.xlu0 %v959, 16
      %v1655 = vpop.permute.xlu0 %1654
      %1656 = vrot.lane.b32.xlu0 %v960, 16
      %v1657 = vpop.permute.xlu0 %1656
      %1658 = vrot.lane.b32.xlu0 %v961, 16
      %v1659 = vpop.permute.xlu0 %1658
      %1660 = vrot.lane.b32.xlu0 %v962, 16
      %v1661 = vpop.permute.xlu0 %1660
      %1662 = vrot.lane.b32.xlu0 %v963, 16
      %v1663 = vpop.permute.xlu0 %1662
      %1664 = vrot.lane.b32.xlu0 %v964, 16
      %v1665 = vpop.permute.xlu0 %1664
      %1666 = vrot.lane.b32.xlu0 %v965, 16
      %v1667 = vpop.permute.xlu0 %1666
      %1668 = vrot.lane.b32.xlu0 %v966, 16
      %v1669 = vpop.permute.xlu0 %1668
      %1670 = vrot.lane.b32.xlu0 %v967, 16
      %v1671 = vpop.permute.xlu0 %1670
      %1672 = vrot.lane.b32.xlu0 %v968, 16
      %v1673 = vpop.permute.xlu0 %1672
      %1674 = vrot.lane.b32.xlu0 %v969, 16
      %v1675 = vpop.permute.xlu0 %1674
      %1676 = vrot.lane.b32.xlu0 %v970, 16
      %v1677 = vpop.permute.xlu0 %1676
      %1678 = vrot.lane.b32.xlu0 %v971, 16
      %v1679 = vpop.permute.xlu0 %1678
      %1680 = vrot.lane.b32.xlu0 %v972, 16
      %v1681 = vpop.permute.xlu0 %1680
      %1682 = vrot.lane.b32.xlu0 %v973, 16
      %v1683 = vpop.permute.xlu0 %1682
      %1684 = vrot.lane.b32.xlu0 %v974, 16
      %v1685 = vpop.permute.xlu0 %1684
      %1686 = vrot.lane.b32.xlu0 %v975, 16
      %v1687 = vpop.permute.xlu0 %1686
      %1688 = vrot.lane.b32.xlu0 %v976, 16
      %v1689 = vpop.permute.xlu0 %1688
      %1690 = vrot.lane.b32.xlu0 %v977, 16
      %v1691 = vpop.permute.xlu0 %1690
      %1692 = vrot.lane.b32.xlu0 %v978, 16
      %v1693 = vpop.permute.xlu0 %1692
      %1694 = vrot.lane.b32.xlu0 %v979, 16
      %v1695 = vpop.permute.xlu0 %1694
      %1696 = vrot.lane.b32.xlu0 %v980, 16
      %v1697 = vpop.permute.xlu0 %1696
      %1698 = vrot.lane.b32.xlu0 %v981, 16
      %v1699 = vpop.permute.xlu0 %1698
      %1700 = vrot.lane.b32.xlu0 %v982, 16
      %v1701 = vpop.permute.xlu0 %1700
      %1702 = vrot.lane.b32.xlu0 %v983, 16
      %v1703 = vpop.permute.xlu0 %1702
      %1704 = vrot.lane.b32.xlu0 %v1640, 16
      %v1705 = vpop.permute.xlu0 %1704
      %1706 = vrot.lane.b32.xlu0 %v1641, 16
      %v1707 = vpop.permute.xlu0 %1706
      %vm1740 = vcmask 158848
      %1741 = vst.msk [vmem:[#allocation3] sm:$0xf] %vm1740, %v1645
      %1742 = vst.msk [vmem:[#allocation3 + $0x4] sm:$0xf] %vm1740, %v1647
      %1743 = vst.msk [vmem:[#allocation3 + $0x8] sm:$0xf] %vm1740, %v1649
      %1744 = vst.msk [vmem:[#allocation3 + $0xc] sm:$0xf] %vm1740, %v1651
      %1745 = vst.msk [vmem:[#allocation3 + $0x10] sm:$0xf] %vm1740, %v1653
      %1746 = vst.msk [vmem:[#allocation3 + $0x14] sm:$0xf] %vm1740, %v1655
      %1747 = vst.msk [vmem:[#allocation3 + $0x18] sm:$0xf] %vm1740, %v1657
      %1748 = vst.msk [vmem:[#allocation3 + $0x1c] sm:$0xf] %vm1740, %v1659
      %1749 = vst.msk [vmem:[#allocation3 + $0x20] sm:$0xf] %vm1740, %v1661
      %1750 = vst.msk [vmem:[#allocation3 + $0x24] sm:$0xf] %vm1740, %v1663
      %1751 = vst.msk [vmem:[#allocation3 + $0x28] sm:$0xf] %vm1740, %v1665
      %1752 = vst.msk [vmem:[#allocation3 + $0x2c] sm:$0xf] %vm1740, %v1667
      %1753 = vst.msk [vmem:[#allocation3 + $0x30] sm:$0xf] %vm1740, %v1669
      %1754 = vst.msk [vmem:[#allocation3 + $0x34] sm:$0xf] %vm1740, %v1671
      %1755 = vst.msk [vmem:[#allocation3 + $0x38] sm:$0xf] %vm1740, %v1673
      %1756 = vst.msk [vmem:[#allocation3 + $0x3c] sm:$0xf] %vm1740, %v1675
      %1757 = vst.msk [vmem:[#allocation3 + $0x40] sm:$0xf] %vm1740, %v1677
      %1758 = vst.msk [vmem:[#allocation3 + $0x44] sm:$0xf] %vm1740, %v1679
      %1759 = vst.msk [vmem:[#allocation3 + $0x48] sm:$0xf] %vm1740, %v1681
      %1760 = vst.msk [vmem:[#allocation3 + $0x4c] sm:$0xf] %vm1740, %v1683
      %1761 = vst.msk [vmem:[#allocation3 + $0x50] sm:$0xf] %vm1740, %v1685
      %1762 = vst.msk [vmem:[#allocation3 + $0x54] sm:$0xf] %vm1740, %v1687
      %1763 = vst.msk [vmem:[#allocation3 + $0x58] sm:$0xf] %vm1740, %v1689
      %1764 = vst.msk [vmem:[#allocation3 + $0x5c] sm:$0xf] %vm1740, %v1691
      %1765 = vst.msk [vmem:[#allocation3 + $0x60] sm:$0xf] %vm1740, %v1693
      %1766 = vst.msk [vmem:[#allocation3 + $0x64] sm:$0xf] %vm1740, %v1695
      %1767 = vst.msk [vmem:[#allocation3 + $0x68] sm:$0xf] %vm1740, %v1697
      %1768 = vst.msk [vmem:[#allocation3 + $0x6c] sm:$0xf] %vm1740, %v1699
      %1769 = vst.msk [vmem:[#allocation3 + $0x70] sm:$0xf] %vm1740, %v1701
      %1770 = vst.msk [vmem:[#allocation3 + $0x74] sm:$0xf] %vm1740, %v1703
      %1771 = vst.msk [vmem:[#allocation3 + $0x78] sm:$0xf] %vm1740, %v1705
      %1772 = vst.msk [vmem:[#allocation3 + $0x7c] sm:$0xf] %vm1740, %v1707
      %v1774 = vrot.slane %v719, 1
      %v1775 = vrot.slane %v720, 1
      %v1776 = vsel %vm1161, %v1774, %v1775
      %v1777 = vrot.slane %v721, 1
      %v1778 = vsel %vm1161, %v1775, %v1777
      %v1781 = vpack.c.bf16 %v1776, %v1776
      %v1782 = vpack.c.bf16 %v1778, %v1778
      %1785 = vrot.lane.b32.xlu0 %v1276, 20
      %v1786 = vpop.permute.xlu0 %1785
      %1787 = vrot.lane.b32.xlu0 %v1277, 20
      %v1788 = vpop.permute.xlu0 %1787
      %1789 = vrot.lane.b32.xlu0 %v1278, 20
      %v1790 = vpop.permute.xlu0 %1789
      %1791 = vrot.lane.b32.xlu0 %v1279, 20
      %v1792 = vpop.permute.xlu0 %1791
      %1793 = vrot.lane.b32.xlu0 %v1280, 20
      %v1794 = vpop.permute.xlu0 %1793
      %1795 = vrot.lane.b32.xlu0 %v1281, 20
      %v1796 = vpop.permute.xlu0 %1795
      %1797 = vrot.lane.b32.xlu0 %v1282, 20
      %v1798 = vpop.permute.xlu0 %1797
      %1799 = vrot.lane.b32.xlu0 %v1283, 20
      %v1800 = vpop.permute.xlu0 %1799
      %1801 = vrot.lane.b32.xlu0 %v1284, 20
      %v1802 = vpop.permute.xlu0 %1801
      %1803 = vrot.lane.b32.xlu0 %v1285, 20
      %v1804 = vpop.permute.xlu0 %1803
      %1805 = vrot.lane.b32.xlu0 %v1286, 20
      %v1806 = vpop.permute.xlu0 %1805
      %1807 = vrot.lane.b32.xlu0 %v1287, 20
      %v1808 = vpop.permute.xlu0 %1807
      %1809 = vrot.lane.b32.xlu0 %v1288, 20
      %v1810 = vpop.permute.xlu0 %1809
      %1811 = vrot.lane.b32.xlu0 %v1289, 20
      %v1812 = vpop.permute.xlu0 %1811
      %1813 = vrot.lane.b32.xlu0 %v1290, 20
      %v1814 = vpop.permute.xlu0 %1813
      %1815 = vrot.lane.b32.xlu0 %v1291, 20
      %v1816 = vpop.permute.xlu0 %1815
      %1817 = vrot.lane.b32.xlu0 %v1292, 20
      %v1818 = vpop.permute.xlu0 %1817
      %1819 = vrot.lane.b32.xlu0 %v1293, 20
      %v1820 = vpop.permute.xlu0 %1819
      %1821 = vrot.lane.b32.xlu0 %v1294, 20
      %v1822 = vpop.permute.xlu0 %1821
      %1823 = vrot.lane.b32.xlu0 %v1295, 20
      %v1824 = vpop.permute.xlu0 %1823
      %1825 = vrot.lane.b32.xlu0 %v1296, 20
      %v1826 = vpop.permute.xlu0 %1825
      %1827 = vrot.lane.b32.xlu0 %v1297, 20
      %v1828 = vpop.permute.xlu0 %1827
      %1829 = vrot.lane.b32.xlu0 %v1298, 20
      %v1830 = vpop.permute.xlu0 %1829
      %1831 = vrot.lane.b32.xlu0 %v1299, 20
      %v1832 = vpop.permute.xlu0 %1831
      %1833 = vrot.lane.b32.xlu0 %v1300, 20
      %v1834 = vpop.permute.xlu0 %1833
      %1835 = vrot.lane.b32.xlu0 %v1301, 20
      %v1836 = vpop.permute.xlu0 %1835
      %1837 = vrot.lane.b32.xlu0 %v1302, 20
      %v1838 = vpop.permute.xlu0 %1837
      %1839 = vrot.lane.b32.xlu0 %v1303, 20
      %v1840 = vpop.permute.xlu0 %1839
      %1841 = vrot.lane.b32.xlu0 %v1304, 20
      %v1842 = vpop.permute.xlu0 %1841
      %1843 = vrot.lane.b32.xlu0 %v1305, 20
      %v1844 = vpop.permute.xlu0 %1843
      %1845 = vrot.lane.b32.xlu0 %v1781, 20
      %v1846 = vpop.permute.xlu0 %1845
      %1847 = vrot.lane.b32.xlu0 %v1782, 20
      %v1848 = vpop.permute.xlu0 %1847
      %vm1881 = vcmask 191648
      %1882 = vst.msk [vmem:[#allocation3] sm:$0xf] %vm1881, %v1786
      %1883 = vst.msk [vmem:[#allocation3 + $0x4] sm:$0xf] %vm1881, %v1788
      %1884 = vst.msk [vmem:[#allocation3 + $0x8] sm:$0xf] %vm1881, %v1790
      %1885 = vst.msk [vmem:[#allocation3 + $0xc] sm:$0xf] %vm1881, %v1792
      %1886 = vst.msk [vmem:[#allocation3 + $0x10] sm:$0xf] %vm1881, %v1794
      %1887 = vst.msk [vmem:[#allocation3 + $0x14] sm:$0xf] %vm1881, %v1796
      %1888 = vst.msk [vmem:[#allocation3 + $0x18] sm:$0xf] %vm1881, %v1798
      %1889 = vst.msk [vmem:[#allocation3 + $0x1c] sm:$0xf] %vm1881, %v1800
      %1890 = vst.msk [vmem:[#allocation3 + $0x20] sm:$0xf] %vm1881, %v1802
      %1891 = vst.msk [vmem:[#allocation3 + $0x24] sm:$0xf] %vm1881, %v1804
      %1892 = vst.msk [vmem:[#allocation3 + $0x28] sm:$0xf] %vm1881, %v1806
      %1893 = vst.msk [vmem:[#allocation3 + $0x2c] sm:$0xf] %vm1881, %v1808
      %1894 = vst.msk [vmem:[#allocation3 + $0x30] sm:$0xf] %vm1881, %v1810
      %1895 = vst.msk [vmem:[#allocation3 + $0x34] sm:$0xf] %vm1881, %v1812
      %1896 = vst.msk [vmem:[#allocation3 + $0x38] sm:$0xf] %vm1881, %v1814
      %1897 = vst.msk [vmem:[#allocation3 + $0x3c] sm:$0xf] %vm1881, %v1816
      %1898 = vst.msk [vmem:[#allocation3 + $0x40] sm:$0xf] %vm1881, %v1818
      %1899 = vst.msk [vmem:[#allocation3 + $0x44] sm:$0xf] %vm1881, %v1820
      %1900 = vst.msk [vmem:[#allocation3 + $0x48] sm:$0xf] %vm1881, %v1822
      %1901 = vst.msk [vmem:[#allocation3 + $0x4c] sm:$0xf] %vm1881, %v1824
      %1902 = vst.msk [vmem:[#allocation3 + $0x50] sm:$0xf] %vm1881, %v1826
      %1903 = vst.msk [vmem:[#allocation3 + $0x54] sm:$0xf] %vm1881, %v1828
      %1904 = vst.msk [vmem:[#allocation3 + $0x58] sm:$0xf] %vm1881, %v1830
      %1905 = vst.msk [vmem:[#allocation3 + $0x5c] sm:$0xf] %vm1881, %v1832
      %1906 = vst.msk [vmem:[#allocation3 + $0x60] sm:$0xf] %vm1881, %v1834
      %1907 = vst.msk [vmem:[#allocation3 + $0x64] sm:$0xf] %vm1881, %v1836
      %1908 = vst.msk [vmem:[#allocation3 + $0x68] sm:$0xf] %vm1881, %v1838
      %1909 = vst.msk [vmem:[#allocation3 + $0x6c] sm:$0xf] %vm1881, %v1840
      %1910 = vst.msk [vmem:[#allocation3 + $0x70] sm:$0xf] %vm1881, %v1842
      %1911 = vst.msk [vmem:[#allocation3 + $0x74] sm:$0xf] %vm1881, %v1844
      %1912 = vst.msk [vmem:[#allocation3 + $0x78] sm:$0xf] %vm1881, %v1846
      %1913 = vst.msk [vmem:[#allocation3 + $0x7c] sm:$0xf] %vm1881, %v1848
      %v1917 = vrot.slane %v722, 7
      %v1918 = vrot.slane %v723, 7
      %v1919 = vsel %vm774, %v1917, %v1918
      %v1920 = vrot.slane %v724, 7
      %v1921 = vsel %vm774, %v1918, %v1920
      %v1924 = vpack.c.bf16 %v1919, %v1919
      %v1925 = vpack.c.bf16 %v1921, %v1921
      %1928 = vrot.lane.b32.xlu0 %v891, 24
      %v1929 = vpop.permute.xlu0 %1928
      %1930 = vrot.lane.b32.xlu0 %v892, 24
      %v1931 = vpop.permute.xlu0 %1930
      %1932 = vrot.lane.b32.xlu0 %v893, 24
      %v1933 = vpop.permute.xlu0 %1932
      %1934 = vrot.lane.b32.xlu0 %v894, 24
      %v1935 = vpop.permute.xlu0 %1934
      %1936 = vrot.lane.b32.xlu0 %v895, 24
      %v1937 = vpop.permute.xlu0 %1936
      %1938 = vrot.lane.b32.xlu0 %v896, 24
      %v1939 = vpop.permute.xlu0 %1938
      %1940 = vrot.lane.b32.xlu0 %v897, 24
      %v1941 = vpop.permute.xlu0 %1940
      %1942 = vrot.lane.b32.xlu0 %v898, 24
      %v1943 = vpop.permute.xlu0 %1942
      %1944 = vrot.lane.b32.xlu0 %v899, 24
      %v1945 = vpop.permute.xlu0 %1944
      %1946 = vrot.lane.b32.xlu0 %v900, 24
      %v1947 = vpop.permute.xlu0 %1946
      %1948 = vrot.lane.b32.xlu0 %v901, 24
      %v1949 = vpop.permute.xlu0 %1948
      %1950 = vrot.lane.b32.xlu0 %v902, 24
      %v1951 = vpop.permute.xlu0 %1950
      %1952 = vrot.lane.b32.xlu0 %v903, 24
      %v1953 = vpop.permute.xlu0 %1952
      %1954 = vrot.lane.b32.xlu0 %v904, 24
      %v1955 = vpop.permute.xlu0 %1954
      %1956 = vrot.lane.b32.xlu0 %v905, 24
      %v1957 = vpop.permute.xlu0 %1956
      %1958 = vrot.lane.b32.xlu0 %v906, 24
      %v1959 = vpop.permute.xlu0 %1958
      %1960 = vrot.lane.b32.xlu0 %v907, 24
      %v1961 = vpop.permute.xlu0 %1960
      %1962 = vrot.lane.b32.xlu0 %v908, 24
      %v1963 = vpop.permute.xlu0 %1962
      %1964 = vrot.lane.b32.xlu0 %v909, 24
      %v1965 = vpop.permute.xlu0 %1964
      %1966 = vrot.lane.b32.xlu0 %v910, 24
      %v1967 = vpop.permute.xlu0 %1966
      %1968 = vrot.lane.b32.xlu0 %v911, 24
      %v1969 = vpop.permute.xlu0 %1968
      %1970 = vrot.lane.b32.xlu0 %v912, 24
      %v1971 = vpop.permute.xlu0 %1970
      %1972 = vrot.lane.b32.xlu0 %v913, 24
      %v1973 = vpop.permute.xlu0 %1972
      %1974 = vrot.lane.b32.xlu0 %v914, 24
      %v1975 = vpop.permute.xlu0 %1974
      %1976 = vrot.lane.b32.xlu0 %v915, 24
      %v1977 = vpop.permute.xlu0 %1976
      %1978 = vrot.lane.b32.xlu0 %v916, 24
      %v1979 = vpop.permute.xlu0 %1978
      %1980 = vrot.lane.b32.xlu0 %v917, 24
      %v1981 = vpop.permute.xlu0 %1980
      %1982 = vrot.lane.b32.xlu0 %v918, 24
      %v1983 = vpop.permute.xlu0 %1982
      %1984 = vrot.lane.b32.xlu0 %v1477, 24
      %v1985 = vpop.permute.xlu0 %1984
      %1986 = vrot.lane.b32.xlu0 %v1478, 24
      %v1987 = vpop.permute.xlu0 %1986
      %1988 = vrot.lane.b32.xlu0 %v1924, 24
      %v1989 = vpop.permute.xlu0 %1988
      %1990 = vrot.lane.b32.xlu0 %v1925, 24
      %v1991 = vpop.permute.xlu0 %1990
      %vm2024 = vcmask 224448
      %2025 = vst.msk [vmem:[#allocation3] sm:$0xf] %vm2024, %v1929
      %2026 = vst.msk [vmem:[#allocation3 + $0x4] sm:$0xf] %vm2024, %v1931
      %2027 = vst.msk [vmem:[#allocation3 + $0x8] sm:$0xf] %vm2024, %v1933
      %2028 = vst.msk [vmem:[#allocation3 + $0xc] sm:$0xf] %vm2024, %v1935
      %2029 = vst.msk [vmem:[#allocation3 + $0x10] sm:$0xf] %vm2024, %v1937
      %2030 = vst.msk [vmem:[#allocation3 + $0x14] sm:$0xf] %vm2024, %v1939
      %2031 = vst.msk [vmem:[#allocation3 + $0x18] sm:$0xf] %vm2024, %v1941
      %2032 = vst.msk [vmem:[#allocation3 + $0x1c] sm:$0xf] %vm2024, %v1943
      %2033 = vst.msk [vmem:[#allocation3 + $0x20] sm:$0xf] %vm2024, %v1945
      %2034 = vst.msk [vmem:[#allocation3 + $0x24] sm:$0xf] %vm2024, %v1947
      %2035 = vst.msk [vmem:[#allocation3 + $0x28] sm:$0xf] %vm2024, %v1949
      %2036 = vst.msk [vmem:[#allocation3 + $0x2c] sm:$0xf] %vm2024, %v1951
      %2037 = vst.msk [vmem:[#allocation3 + $0x30] sm:$0xf] %vm2024, %v1953
      %2038 = vst.msk [vmem:[#allocation3 + $0x34] sm:$0xf] %vm2024, %v1955
      %2039 = vst.msk [vmem:[#allocation3 + $0x38] sm:$0xf] %vm2024, %v1957
      %2040 = vst.msk [vmem:[#allocation3 + $0x3c] sm:$0xf] %vm2024, %v1959
      %2041 = vst.msk [vmem:[#allocation3 + $0x40] sm:$0xf] %vm2024, %v1961
      %2042 = vst.msk [vmem:[#allocation3 + $0x44] sm:$0xf] %vm2024, %v1963
      %2043 = vst.msk [vmem:[#allocation3 + $0x48] sm:$0xf] %vm2024, %v1965
      %2044 = vst.msk [vmem:[#allocation3 + $0x4c] sm:$0xf] %vm2024, %v1967
      %2045 = vst.msk [vmem:[#allocation3 + $0x50] sm:$0xf] %vm2024, %v1969
      %2046 = vst.msk [vmem:[#allocation3 + $0x54] sm:$0xf] %vm2024, %v1971
      %2047 = vst.msk [vmem:[#allocation3 + $0x58] sm:$0xf] %vm2024, %v1973
      %2048 = vst.msk [vmem:[#allocation3 + $0x5c] sm:$0xf] %vm2024, %v1975
      %2049 = vst.msk [vmem:[#allocation3 + $0x60] sm:$0xf] %vm2024, %v1977
      %2050 = vst.msk [vmem:[#allocation3 + $0x64] sm:$0xf] %vm2024, %v1979
      %2051 = vst.msk [vmem:[#allocation3 + $0x68] sm:$0xf] %vm2024, %v1981
      %2052 = vst.msk [vmem:[#allocation3 + $0x6c] sm:$0xf] %vm2024, %v1983
      %2053 = vst.msk [vmem:[#allocation3 + $0x70] sm:$0xf] %vm2024, %v1985
      %2054 = vst.msk [vmem:[#allocation3 + $0x74] sm:$0xf] %vm2024, %v1987
      %2055 = vst.msk [vmem:[#allocation3 + $0x78] sm:$0xf] %vm2024, %v1989
      %2056 = vst.msk [vmem:[#allocation3 + $0x7c] sm:$0xf] %vm2024, %v1991
      %v2057 = vpack.c.bf16 %v723, %v723
      %v2058 = vpack.c.bf16 %v724, %v724
      %2061 = vrot.lane.b32.xlu0 %v956, 28
      %v2062 = vpop.permute.xlu0 %2061
      %2063 = vrot.lane.b32.xlu0 %v957, 28
      %v2064 = vpop.permute.xlu0 %2063
      %2065 = vrot.lane.b32.xlu0 %v958, 28
      %v2066 = vpop.permute.xlu0 %2065
      %2067 = vrot.lane.b32.xlu0 %v959, 28
      %v2068 = vpop.permute.xlu0 %2067
      %2069 = vrot.lane.b32.xlu0 %v960, 28
      %v2070 = vpop.permute.xlu0 %2069
      %2071 = vrot.lane.b32.xlu0 %v961, 28
      %v2072 = vpop.permute.xlu0 %2071
      %2073 = vrot.lane.b32.xlu0 %v962, 28
      %v2074 = vpop.permute.xlu0 %2073
      %2075 = vrot.lane.b32.xlu0 %v963, 28
      %v2076 = vpop.permute.xlu0 %2075
      %2077 = vrot.lane.b32.xlu0 %v964, 28
      %v2078 = vpop.permute.xlu0 %2077
      %2079 = vrot.lane.b32.xlu0 %v965, 28
      %v2080 = vpop.permute.xlu0 %2079
      %2081 = vrot.lane.b32.xlu0 %v966, 28
      %v2082 = vpop.permute.xlu0 %2081
      %2083 = vrot.lane.b32.xlu0 %v967, 28
      %v2084 = vpop.permute.xlu0 %2083
      %2085 = vrot.lane.b32.xlu0 %v968, 28
      %v2086 = vpop.permute.xlu0 %2085
      %2087 = vrot.lane.b32.xlu0 %v969, 28
      %v2088 = vpop.permute.xlu0 %2087
      %2089 = vrot.lane.b32.xlu0 %v970, 28
      %v2090 = vpop.permute.xlu0 %2089
      %2091 = vrot.lane.b32.xlu0 %v971, 28
      %v2092 = vpop.permute.xlu0 %2091
      %2093 = vrot.lane.b32.xlu0 %v972, 28
      %v2094 = vpop.permute.xlu0 %2093
      %2095 = vrot.lane.b32.xlu0 %v973, 28
      %v2096 = vpop.permute.xlu0 %2095
      %2097 = vrot.lane.b32.xlu0 %v974, 28
      %v2098 = vpop.permute.xlu0 %2097
      %2099 = vrot.lane.b32.xlu0 %v975, 28
      %v2100 = vpop.permute.xlu0 %2099
      %2101 = vrot.lane.b32.xlu0 %v976, 28
      %v2102 = vpop.permute.xlu0 %2101
      %2103 = vrot.lane.b32.xlu0 %v977, 28
      %v2104 = vpop.permute.xlu0 %2103
      %2105 = vrot.lane.b32.xlu0 %v978, 28
      %v2106 = vpop.permute.xlu0 %2105
      %2107 = vrot.lane.b32.xlu0 %v979, 28
      %v2108 = vpop.permute.xlu0 %2107
      %2109 = vrot.lane.b32.xlu0 %v980, 28
      %v2110 = vpop.permute.xlu0 %2109
      %2111 = vrot.lane.b32.xlu0 %v981, 28
      %v2112 = vpop.permute.xlu0 %2111
      %2113 = vrot.lane.b32.xlu0 %v982, 28
      %v2114 = vpop.permute.xlu0 %2113
      %2115 = vrot.lane.b32.xlu0 %v983, 28
      %v2116 = vpop.permute.xlu0 %2115
      %2117 = vrot.lane.b32.xlu0 %v1640, 28
      %v2118 = vpop.permute.xlu0 %2117
      %2119 = vrot.lane.b32.xlu0 %v1641, 28
      %v2120 = vpop.permute.xlu0 %2119
      %2121 = vrot.lane.b32.xlu0 %v2057, 28
      %v2122 = vpop.permute.xlu0 %2121
      %2123 = vrot.lane.b32.xlu0 %v2058, 28
      %v2124 = vpop.permute.xlu0 %2123
      %vm2157 = vcmask 257248
      %2158 = vst.msk [vmem:[#allocation3] sm:$0xf] %vm2157, %v2062
      %2159 = vst.msk [vmem:[#allocation3 + $0x4] sm:$0xf] %vm2157, %v2064
      %2160 = vst.msk [vmem:[#allocation3 + $0x8] sm:$0xf] %vm2157, %v2066
      %2161 = vst.msk [vmem:[#allocation3 + $0xc] sm:$0xf] %vm2157, %v2068
      %2162 = vst.msk [vmem:[#allocation3 + $0x10] sm:$0xf] %vm2157, %v2070
      %2163 = vst.msk [vmem:[#allocation3 + $0x14] sm:$0xf] %vm2157, %v2072
      %2164 = vst.msk [vmem:[#allocation3 + $0x18] sm:$0xf] %vm2157, %v2074
      %2165 = vst.msk [vmem:[#allocation3 + $0x1c] sm:$0xf] %vm2157, %v2076
      %2166 = vst.msk [vmem:[#allocation3 + $0x20] sm:$0xf] %vm2157, %v2078
      %2167 = vst.msk [vmem:[#allocation3 + $0x24] sm:$0xf] %vm2157, %v2080
      %2168 = vst.msk [vmem:[#allocation3 + $0x28] sm:$0xf] %vm2157, %v2082
      %2169 = vst.msk [vmem:[#allocation3 + $0x2c] sm:$0xf] %vm2157, %v2084
      %2170 = vst.msk [vmem:[#allocation3 + $0x30] sm:$0xf] %vm2157, %v2086
      %2171 = vst.msk [vmem:[#allocation3 + $0x34] sm:$0xf] %vm2157, %v2088
      %2172 = vst.msk [vmem:[#allocation3 + $0x38] sm:$0xf] %vm2157, %v2090
      %2173 = vst.msk [vmem:[#allocation3 + $0x3c] sm:$0xf] %vm2157, %v2092
      %2174 = vst.msk [vmem:[#allocation3 + $0x40] sm:$0xf] %vm2157, %v2094
      %2175 = vst.msk [vmem:[#allocation3 + $0x44] sm:$0xf] %vm2157, %v2096
      %2176 = vst.msk [vmem:[#allocation3 + $0x48] sm:$0xf] %vm2157, %v2098
      %2177 = vst.msk [vmem:[#allocation3 + $0x4c] sm:$0xf] %vm2157, %v2100
      %2178 = vst.msk [vmem:[#allocation3 + $0x50] sm:$0xf] %vm2157, %v2102
      %2179 = vst.msk [vmem:[#allocation3 + $0x54] sm:$0xf] %vm2157, %v2104
      %2180 = vst.msk [vmem:[#allocation3 + $0x58] sm:$0xf] %vm2157, %v2106
      %2181 = vst.msk [vmem:[#allocation3 + $0x5c] sm:$0xf] %vm2157, %v2108
      %2182 = vst.msk [vmem:[#allocation3 + $0x60] sm:$0xf] %vm2157, %v2110
      %2183 = vst.msk [vmem:[#allocation3 + $0x64] sm:$0xf] %vm2157, %v2112
      %2184 = vst.msk [vmem:[#allocation3 + $0x68] sm:$0xf] %vm2157, %v2114
      %2185 = vst.msk [vmem:[#allocation3 + $0x6c] sm:$0xf] %vm2157, %v2116
      %2186 = vst.msk [vmem:[#allocation3 + $0x70] sm:$0xf] %vm2157, %v2118
      %2187 = vst.msk [vmem:[#allocation3 + $0x74] sm:$0xf] %vm2157, %v2120
      %2188 = vst.msk [vmem:[#allocation3 + $0x78] sm:$0xf] %vm2157, %v2122
      %2189 = vst.msk [vmem:[#allocation3 + $0x7c] sm:$0xf] %vm2157, %v2124
      %v2191 = vrot.slane %v723, 1
      %v2192 = vrot.slane %v724, 1
      %v2193 = vsel %vm1161, %v2191, %v2192
      %v2194 = vrot.slane %v725, 1
      %v2195 = vsel %vm1161, %v2192, %v2194
      %v2198 = vpack.c.bf16 %v2193, %v2193
      %v2199 = vpack.c.bf16 %v2195, %v2195
      %2202 = vrot.lane.b32.xlu0 %v1278, 32
      %v2203 = vpop.permute.xlu0 %2202
      %2204 = vrot.lane.b32.xlu0 %v1279, 32
      %v2205 = vpop.permute.xlu0 %2204
      %2206 = vrot.lane.b32.xlu0 %v1280, 32
      %v2207 = vpop.permute.xlu0 %2206
      %2208 = vrot.lane.b32.xlu0 %v1281, 32
      %v2209 = vpop.permute.xlu0 %2208
      %2210 = vrot.lane.b32.xlu0 %v1282, 32
      %v2211 = vpop.permute.xlu0 %2210
      %2212 = vrot.lane.b32.xlu0 %v1283, 32
      %v2213 = vpop.permute.xlu0 %2212
      %2214 = vrot.lane.b32.xlu0 %v1284, 32
      %v2215 = vpop.permute.xlu0 %2214
      %2216 = vrot.lane.b32.xlu0 %v1285, 32
      %v2217 = vpop.permute.xlu0 %2216
      %2218 = vrot.lane.b32.xlu0 %v1286, 32
      %v2219 = vpop.permute.xlu0 %2218
      %2220 = vrot.lane.b32.xlu0 %v1287, 32
      %v2221 = vpop.permute.xlu0 %2220
      %2222 = vrot.lane.b32.xlu0 %v1288, 32
      %v2223 = vpop.permute.xlu0 %2222
      %2224 = vrot.lane.b32.xlu0 %v1289, 32
      %v2225 = vpop.permute.xlu0 %2224
      %2226 = vrot.lane.b32.xlu0 %v1290, 32
      %v2227 = vpop.permute.xlu0 %2226
      %2228 = vrot.lane.b32.xlu0 %v1291, 32
      %v2229 = vpop.permute.xlu0 %2228
      %2230 = vrot.lane.b32.xlu0 %v1292, 32
      %v2231 = vpop.permute.xlu0 %2230
      %2232 = vrot.lane.b32.xlu0 %v1293, 32
      %v2233 = vpop.permute.xlu0 %2232
      %2234 = vrot.lane.b32.xlu0 %v1294, 32
      %v2235 = vpop.permute.xlu0 %2234
      %2236 = vrot.lane.b32.xlu0 %v1295, 32
      %v2237 = vpop.permute.xlu0 %2236
      %2238 = vrot.lane.b32.xlu0 %v1296, 32
      %v2239 = vpop.permute.xlu0 %2238
      %2240 = vrot.lane.b32.xlu0 %v1297, 32
      %v2241 = vpop.permute.xlu0 %2240
      %2242 = vrot.lane.b32.xlu0 %v1298, 32
      %v2243 = vpop.permute.xlu0 %2242
      %2244 = vrot.lane.b32.xlu0 %v1299, 32
      %v2245 = vpop.permute.xlu0 %2244
      %2246 = vrot.lane.b32.xlu0 %v1300, 32
      %v2247 = vpop.permute.xlu0 %2246
      %2248 = vrot.lane.b32.xlu0 %v1301, 32
      %v2249 = vpop.permute.xlu0 %2248
      %2250 = vrot.lane.b32.xlu0 %v1302, 32
      %v2251 = vpop.permute.xlu0 %2250
      %2252 = vrot.lane.b32.xlu0 %v1303, 32
      %v2253 = vpop.permute.xlu0 %2252
      %2254 = vrot.lane.b32.xlu0 %v1304, 32
      %v2255 = vpop.permute.xlu0 %2254
      %2256 = vrot.lane.b32.xlu0 %v1305, 32
      %v2257 = vpop.permute.xlu0 %2256
      %2258 = vrot.lane.b32.xlu0 %v1781, 32
      %v2259 = vpop.permute.xlu0 %2258
      %2260 = vrot.lane.b32.xlu0 %v1782, 32
      %v2261 = vpop.permute.xlu0 %2260
      %2262 = vrot.lane.b32.xlu0 %v2198, 32
      %v2263 = vpop.permute.xlu0 %2262
      %2264 = vrot.lane.b32.xlu0 %v2199, 32
      %v2265 = vpop.permute.xlu0 %2264
      %vm2298 = vcmask 290048
      %2299 = vst.msk [vmem:[#allocation3] sm:$0xf] %vm2298, %v2203
      %2300 = vst.msk [vmem:[#allocation3 + $0x4] sm:$0xf] %vm2298, %v2205
      %2301 = vst.msk [vmem:[#allocation3 + $0x8] sm:$0xf] %vm2298, %v2207
      %2302 = vst.msk [vmem:[#allocation3 + $0xc] sm:$0xf] %vm2298, %v2209
      %2303 = vst.msk [vmem:[#allocation3 + $0x10] sm:$0xf] %vm2298, %v2211
      %2304 = vst.msk [vmem:[#allocation3 + $0x14] sm:$0xf] %vm2298, %v2213
      %2305 = vst.msk [vmem:[#allocation3 + $0x18] sm:$0xf] %vm2298, %v2215
      %2306 = vst.msk [vmem:[#allocation3 + $0x1c] sm:$0xf] %vm2298, %v2217
      %2307 = vst.msk [vmem:[#allocation3 + $0x20] sm:$0xf] %vm2298, %v2219
      %2308 = vst.msk [vmem:[#allocation3 + $0x24] sm:$0xf] %vm2298, %v2221
      %2309 = vst.msk [vmem:[#allocation3 + $0x28] sm:$0xf] %vm2298, %v2223
      %2310 = vst.msk [vmem:[#allocation3 + $0x2c] sm:$0xf] %vm2298, %v2225
      %2311 = vst.msk [vmem:[#allocation3 + $0x30] sm:$0xf] %vm2298, %v2227
      %2312 = vst.msk [vmem:[#allocation3 + $0x34] sm:$0xf] %vm2298, %v2229
      %2313 = vst.msk [vmem:[#allocation3 + $0x38] sm:$0xf] %vm2298, %v2231
      %2314 = vst.msk [vmem:[#allocation3 + $0x3c] sm:$0xf] %vm2298, %v2233
      %2315 = vst.msk [vmem:[#allocation3 + $0x40] sm:$0xf] %vm2298, %v2235
      %2316 = vst.msk [vmem:[#allocation3 + $0x44] sm:$0xf] %vm2298, %v2237
      %2317 = vst.msk [vmem:[#allocation3 + $0x48] sm:$0xf] %vm2298, %v2239
      %2318 = vst.msk [vmem:[#allocation3 + $0x4c] sm:$0xf] %vm2298, %v2241
      %2319 = vst.msk [vmem:[#allocation3 + $0x50] sm:$0xf] %vm2298, %v2243
      %2320 = vst.msk [vmem:[#allocation3 + $0x54] sm:$0xf] %vm2298, %v2245
      %2321 = vst.msk [vmem:[#allocation3 + $0x58] sm:$0xf] %vm2298, %v2247
      %2322 = vst.msk [vmem:[#allocation3 + $0x5c] sm:$0xf] %vm2298, %v2249
      %2323 = vst.msk [vmem:[#allocation3 + $0x60] sm:$0xf] %vm2298, %v2251
      %2324 = vst.msk [vmem:[#allocation3 + $0x64] sm:$0xf] %vm2298, %v2253
      %2325 = vst.msk [vmem:[#allocation3 + $0x68] sm:$0xf] %vm2298, %v2255
      %2326 = vst.msk [vmem:[#allocation3 + $0x6c] sm:$0xf] %vm2298, %v2257
      %2327 = vst.msk [vmem:[#allocation3 + $0x70] sm:$0xf] %vm2298, %v2259
      %2328 = vst.msk [vmem:[#allocation3 + $0x74] sm:$0xf] %vm2298, %v2261
      %2329 = vst.msk [vmem:[#allocation3 + $0x78] sm:$0xf] %vm2298, %v2263
      %2330 = vst.msk [vmem:[#allocation3 + $0x7c] sm:$0xf] %vm2298, %v2265
      %v2331 = vld [vmem:[#allocation3] sm:$0xf]
      %v2332 = vld [vmem:[#allocation3 + $0x4] sm:$0xf]
      %v2333 = vld [vmem:[#allocation3 + $0x8] sm:$0xf]
      %v2334 = vld [vmem:[#allocation3 + $0xc] sm:$0xf]
      %v2335 = vld [vmem:[#allocation3 + $0x10] sm:$0xf]
      %v2336 = vld [vmem:[#allocation3 + $0x14] sm:$0xf]
      %v2337 = vld [vmem:[#allocation3 + $0x18] sm:$0xf]
      %v2338 = vld [vmem:[#allocation3 + $0x1c] sm:$0xf]
      %v2339 = vld [vmem:[#allocation3 + $0x20] sm:$0xf]
      %v2340 = vld [vmem:[#allocation3 + $0x24] sm:$0xf]
      %v2341 = vld [vmem:[#allocation3 + $0x28] sm:$0xf]
      %v2342 = vld [vmem:[#allocation3 + $0x2c] sm:$0xf]
      %v2343 = vld [vmem:[#allocation3 + $0x30] sm:$0xf]
      %v2344 = vld [vmem:[#allocation3 + $0x34] sm:$0xf]
      %v2345 = vld [vmem:[#allocation3 + $0x38] sm:$0xf]
      %v2346 = vld [vmem:[#allocation3 + $0x3c] sm:$0xf]
      %v2347 = vld [vmem:[#allocation3 + $0x40] sm:$0xf]
      %v2348 = vld [vmem:[#allocation3 + $0x44] sm:$0xf]
      %v2349 = vld [vmem:[#allocation3 + $0x48] sm:$0xf]
      %v2350 = vld [vmem:[#allocation3 + $0x4c] sm:$0xf]
      %v2351 = vld [vmem:[#allocation3 + $0x50] sm:$0xf]
      %v2352 = vld [vmem:[#allocation3 + $0x54] sm:$0xf]
      %v2353 = vld [vmem:[#allocation3 + $0x58] sm:$0xf]
      %v2354 = vld [vmem:[#allocation3 + $0x5c] sm:$0xf]
      %v2355 = vld [vmem:[#allocation3 + $0x60] sm:$0xf]
      %v2356 = vld [vmem:[#allocation3 + $0x64] sm:$0xf]
      %v2357 = vld [vmem:[#allocation3 + $0x68] sm:$0xf]
      %v2358 = vld [vmem:[#allocation3 + $0x6c] sm:$0xf]
      %v2359 = vld [vmem:[#allocation3 + $0x70] sm:$0xf]
      %v2360 = vld [vmem:[#allocation3 + $0x74] sm:$0xf]
      %v2361 = vld [vmem:[#allocation3 + $0x78] sm:$0xf]
      %v2362 = vld [vmem:[#allocation3 + $0x7c] sm:$0xf]
      %v2363 = vld [vmem:[%s3] sm:$0xf]
      %v2364 = vld [vmem:[%s3 + $0x4] sm:$0xf]
      %v2365 = vld [vmem:[%s3 + $0x8] sm:$0xf]
      %v2366 = vld [vmem:[%s3 + $0xc] sm:$0xf]
      %v2367 = vld [vmem:[%s3 + $0x10] sm:$0x3]
      %v2368 = vld [vmem:[%s4] sm:$0x1]
      %v2370 = vperm.slane %v2368, 0
      %v2404 = vunpack.c.l.b16 %v2331
      %v2405 = vunpack.c.l.b16 %v2332
      %v2406 = vunpack.c.l.b16 %v2333
      %v2407 = vunpack.c.l.b16 %v2334
      %v2408 = vunpack.c.l.b16 %v2335
      %v2409 = vunpack.c.l.b16 %v2336
      %v2410 = vunpack.c.l.b16 %v2337
      %v2411 = vunpack.c.l.b16 %v2338
      %v2412 = vunpack.c.l.b16 %v2339
      %v2413 = vunpack.c.l.b16 %v2340
      %v2414 = vunpack.c.l.b16 %v2341
      %v2415 = vunpack.c.l.b16 %v2342
      %v2416 = vunpack.c.l.b16 %v2343
      %v2417 = vunpack.c.l.b16 %v2344
      %v2418 = vunpack.c.l.b16 %v2345
      %v2419 = vunpack.c.l.b16 %v2346
      %v2420 = vunpack.c.l.b16 %v2347
      %v2421 = vunpack.c.l.b16 %v2348
      %v2422 = vunpack.c.l.b16 %v2349
      %v2423 = vunpack.c.l.b16 %v2350
      %v2424 = vunpack.c.l.b16 %v2351
      %v2425 = vunpack.c.l.b16 %v2352
      %v2426 = vunpack.c.l.b16 %v2353
      %v2427 = vunpack.c.l.b16 %v2354
      %v2428 = vunpack.c.l.b16 %v2355
      %v2429 = vunpack.c.l.b16 %v2356
      %v2430 = vunpack.c.l.b16 %v2357
      %v2431 = vunpack.c.l.b16 %v2358
      %v2432 = vunpack.c.l.b16 %v2359
      %v2433 = vunpack.c.l.b16 %v2360
      %v2434 = vunpack.c.l.b16 %v2361
      %v2435 = vunpack.c.l.b16 %v2362
      %v2436 = vpack.c.b16 %v2405, %v2404
      %v2437 = vpack.c.b16 %v2407, %v2406
      %v2438 = vpack.c.b16 %v2409, %v2408
      %v2439 = vpack.c.b16 %v2411, %v2410
      %v2440 = vpack.c.b16 %v2413, %v2412
      %v2441 = vpack.c.b16 %v2415, %v2414
      %v2442 = vpack.c.b16 %v2417, %v2416
      %v2443 = vpack.c.b16 %v2419, %v2418
      %v2444 = vpack.c.b16 %v2421, %v2420
      %v2445 = vpack.c.b16 %v2423, %v2422
      %v2446 = vpack.c.b16 %v2425, %v2424
      %v2447 = vpack.c.b16 %v2427, %v2426
      %v2448 = vpack.c.b16 %v2429, %v2428
      %v2449 = vpack.c.b16 %v2431, %v2430
      %v2450 = vpack.c.b16 %v2433, %v2432
      %v2451 = vpack.c.b16 %v2435, %v2434
      %v2457 = vunpack.c.l.b16 %v2363
      %v2458 = vunpack.c.l.b16 %v2364
      %v2459 = vunpack.c.l.b16 %v2365
      %v2460 = vunpack.c.l.b16 %v2366
      %v2461 = vunpack.c.l.b16 %v2367
      %v2462 = vpack.c.b16 %v2458, %v2457
      %v2463 = vpack.c.b16 %v2460, %v2459
      %v2464 = vpack.c.b16 %v2461, %v2461
      %vm2467 = vcmask 293888
      %v2469 = vsel %vm2467, %v2436, 0
      %v2472 = vsel %vm2467, %v2437, 0
      %v2475 = vsel %vm2467, %v2438, 0
      %v2478 = vsel %vm2467, %v2439, 0
      %v2481 = vsel %vm2467, %v2440, 0
      %v2484 = vsel %vm2467, %v2441, 0
      %v2487 = vsel %vm2467, %v2442, 0
      %v2490 = vsel %vm2467, %v2443, 0
      %v2493 = vsel %vm2467, %v2444, 0
      %v2496 = vsel %vm2467, %v2445, 0
      %v2499 = vsel %vm2467, %v2446, 0
      %v2502 = vsel %vm2467, %v2447, 0
      %v2505 = vsel %vm2467, %v2448, 0
      %v2508 = vsel %vm2467, %v2449, 0
      %v2511 = vsel %vm2467, %v2450, 0
      %v2514 = vsel %vm2467, %v2451, 0
      %vm2516 = vcmask 1041408
      %v2518 = vsel %vm2516, %v2464, 0
      %2520 = vmatpush.bf16.msra.mxu0 0
      %2521 = vmatpush.bf16.msra.mxu0 0
      %2522 = vmatpush.bf16.msra.mxu0 0
      %2523 = vmatpush.bf16.msra.mxu0 0
      %2524 = vmatpush.bf16.msra.mxu0 0
      %2525 = vmatpush.bf16.msra.mxu0 %v2518
      %2526 = vmatpush.bf16.msra.mxu0 %v2463
      %2527 = vmatpush.bf16.msra.mxu0 %v2462
      %2528 = vmatmul.bf16.gmra.mxu0 %v2469
      %v2529 = vpop.f32.mrf.mxu0
      %v2530 = vadd.f32 %v2370, %v2529
      %v2531 = vpop.f32.mrf.mxu0
      %v2532 = vadd.f32 %v2370, %v2531
      %2533 = vmatmul.bf16.gmra.mxu0 %v2472
      %v2534 = vpop.f32.mrf.mxu0
      %v2535 = vadd.f32 %v2370, %v2534
      %v2536 = vpop.f32.mrf.mxu0
      %v2537 = vadd.f32 %v2370, %v2536
      %2538 = vmatmul.bf16.gmra.mxu0 %v2475
      %v2539 = vpop.f32.mrf.mxu0
      %v2540 = vadd.f32 %v2370, %v2539
      %v2541 = vpop.f32.mrf.mxu0
      %v2542 = vadd.f32 %v2370, %v2541
      %2543 = vmatmul.bf16.gmra.mxu0 %v2478
      %v2544 = vpop.f32.mrf.mxu0
      %v2545 = vadd.f32 %v2370, %v2544
      %v2546 = vpop.f32.mrf.mxu0
      %v2547 = vadd.f32 %v2370, %v2546
      %2548 = vmatmul.bf16.gmra.mxu0 %v2481
      %v2549 = vpop.f32.mrf.mxu0
      %v2550 = vadd.f32 %v2370, %v2549
      %v2551 = vpop.f32.mrf.mxu0
      %v2552 = vadd.f32 %v2370, %v2551
      %2553 = vmatmul.bf16.gmra.mxu0 %v2484
      %v2554 = vpop.f32.mrf.mxu0
      %v2555 = vadd.f32 %v2370, %v2554
      %v2556 = vpop.f32.mrf.mxu0
      %v2557 = vadd.f32 %v2370, %v2556
      %2558 = vmatmul.bf16.gmra.mxu0 %v2487
      %v2559 = vpop.f32.mrf.mxu0
      %v2560 = vadd.f32 %v2370, %v2559
      %v2561 = vpop.f32.mrf.mxu0
      %v2562 = vadd.f32 %v2370, %v2561
      %2563 = vmatmul.bf16.gmra.mxu0 %v2490
      %v2564 = vpop.f32.mrf.mxu0
      %v2565 = vadd.f32 %v2370, %v2564
      %v2566 = vpop.f32.mrf.mxu0
      %v2567 = vadd.f32 %v2370, %v2566
      %2568 = vmatmul.bf16.gmra.mxu0 %v2493
      %v2569 = vpop.f32.mrf.mxu0
      %v2570 = vadd.f32 %v2370, %v2569
      %v2571 = vpop.f32.mrf.mxu0
      %v2572 = vadd.f32 %v2370, %v2571
      %2573 = vmatmul.bf16.gmra.mxu0 %v2496
      %v2574 = vpop.f32.mrf.mxu0
      %v2575 = vadd.f32 %v2370, %v2574
      %v2576 = vpop.f32.mrf.mxu0
      %v2577 = vadd.f32 %v2370, %v2576
      %2578 = vmatmul.bf16.gmra.mxu0 %v2499
      %v2579 = vpop.f32.mrf.mxu0
      %v2580 = vadd.f32 %v2370, %v2579
      %v2581 = vpop.f32.mrf.mxu0
      %v2582 = vadd.f32 %v2370, %v2581
      %2583 = vmatmul.bf16.gmra.mxu0 %v2502
      %v2584 = vpop.f32.mrf.mxu0
      %v2585 = vadd.f32 %v2370, %v2584
      %v2586 = vpop.f32.mrf.mxu0
      %v2587 = vadd.f32 %v2370, %v2586
      %2588 = vmatmul.bf16.gmra.mxu0 %v2505
      %v2589 = vpop.f32.mrf.mxu0
      %v2590 = vadd.f32 %v2370, %v2589
      %v2591 = vpop.f32.mrf.mxu0
      %v2592 = vadd.f32 %v2370, %v2591
      %2593 = vmatmul.bf16.gmra.mxu0 %v2508
      %v2594 = vpop.f32.mrf.mxu0
      %v2595 = vadd.f32 %v2370, %v2594
      %v2596 = vpop.f32.mrf.mxu0
      %v2597 = vadd.f32 %v2370, %v2596
      %2598 = vmatmul.bf16.gmra.mxu0 %v2511
      %v2599 = vpop.f32.mrf.mxu0
      %v2600 = vadd.f32 %v2370, %v2599
      %v2601 = vpop.f32.mrf.mxu0
      %v2602 = vadd.f32 %v2370, %v2601
      %2603 = vmatmul.bf16.gmra.mxu0 %v2514
      %v2604 = vpop.f32.mrf.mxu0
      %v2605 = vadd.f32 %v2370, %v2604
      %v2606 = vpop.f32.mrf.mxu0
      %v2607 = vadd.f32 %v2370, %v2606
      %2608 = vdwg.mxu0
      %v2609 = vmax.f32 %v2530, 0.0
      %v2610 = vmax.f32 %v2532, 0.0
      %v2611 = vmax.f32 %v2535, 0.0
      %v2612 = vmax.f32 %v2537, 0.0
      %v2613 = vmax.f32 %v2540, 0.0
      %v2614 = vmax.f32 %v2542, 0.0
      %v2615 = vmax.f32 %v2545, 0.0
      %v2616 = vmax.f32 %v2547, 0.0
      %v2617 = vmax.f32 %v2550, 0.0
      %v2618 = vmax.f32 %v2552, 0.0
      %v2619 = vmax.f32 %v2555, 0.0
      %v2620 = vmax.f32 %v2557, 0.0
      %v2621 = vmax.f32 %v2560, 0.0
      %v2622 = vmax.f32 %v2562, 0.0
      %v2623 = vmax.f32 %v2565, 0.0
      %v2624 = vmax.f32 %v2567, 0.0
      %v2625 = vmax.f32 %v2570, 0.0
      %v2626 = vmax.f32 %v2572, 0.0
      %v2627 = vmax.f32 %v2575, 0.0
      %v2628 = vmax.f32 %v2577, 0.0
      %v2629 = vmax.f32 %v2580, 0.0
      %v2630 = vmax.f32 %v2582, 0.0
      %v2631 = vmax.f32 %v2585, 0.0
      %v2632 = vmax.f32 %v2587, 0.0
      %v2633 = vmax.f32 %v2590, 0.0
      %v2634 = vmax.f32 %v2592, 0.0
      %v2635 = vmax.f32 %v2595, 0.0
      %v2636 = vmax.f32 %v2597, 0.0
      %v2637 = vmax.f32 %v2600, 0.0
      %v2638 = vmax.f32 %v2602, 0.0
      %v2639 = vmax.f32 %v2605, 0.0
      %v2640 = vmax.f32 %v2607, 0.0
      %v2641 = vpack.c.bf16 %v2610, %v2609
      %v2642 = vpack.c.bf16 %v2612, %v2611
      %v2643 = vpack.c.bf16 %v2614, %v2613
      %v2644 = vpack.c.bf16 %v2616, %v2615
      %v2645 = vpack.c.bf16 %v2618, %v2617
      %v2646 = vpack.c.bf16 %v2620, %v2619
      %v2647 = vpack.c.bf16 %v2622, %v2621
      %v2648 = vpack.c.bf16 %v2624, %v2623
      %v2649 = vpack.c.bf16 %v2626, %v2625
      %v2650 = vpack.c.bf16 %v2628, %v2627
      %v2651 = vpack.c.bf16 %v2630, %v2629
      %v2652 = vpack.c.bf16 %v2632, %v2631
      %v2653 = vpack.c.bf16 %v2634, %v2633
      %v2654 = vpack.c.bf16 %v2636, %v2635
      %v2655 = vpack.c.bf16 %v2638, %v2637
      %v2656 = vpack.c.bf16 %v2640, %v2639
      %v2657 = vld [vmem:[%s5] sm:$0x3]
      %v2658 = vld [vmem:[%s6] sm:$0x1]
      %v2660 = vperm.slane %v2658, 0
      %v2663 = vsel %vm574, %v2641, 0
      %v2666 = vsel %vm574, %v2642, 0
      %v2669 = vsel %vm574, %v2643, 0
      %v2672 = vsel %vm574, %v2644, 0
      %v2675 = vsel %vm574, %v2645, 0
      %v2678 = vsel %vm574, %v2646, 0
      %v2681 = vsel %vm574, %v2647, 0
      %v2684 = vsel %vm574, %v2648, 0
      %v2687 = vsel %vm574, %v2649, 0
      %v2690 = vsel %vm574, %v2650, 0
      %v2693 = vsel %vm574, %v2651, 0
      %v2696 = vsel %vm574, %v2652, 0
      %v2699 = vsel %vm574, %v2653, 0
      %v2702 = vsel %vm574, %v2654, 0
      %v2705 = vsel %vm574, %v2655, 0
      %v2708 = vsel %vm574, %v2656, 0
      %v2711 = vsel %vm2516, %v2657, 0
      %2713 = vmatpush.bf16.msra.mxu0 0
      %2714 = vmatpush.bf16.msra.mxu0 0
      %2715 = vmatpush.bf16.msra.mxu0 0
      %2716 = vmatpush.bf16.msra.mxu0 0
      %2717 = vmatpush.bf16.msra.mxu0 0
      %2718 = vmatpush.bf16.msra.mxu0 0
      %2719 = vmatpush.bf16.msra.mxu0 0
      %2720 = vmatpush.bf16.msra.mxu0 %v2711
      %2721 = vmatmul.bf16.gmra.mxu0 %v2663
      %v2722 = vpop.f32.mrf.mxu0
      %v2723 = vadd.f32 %v2660, %v2722
      %v2724 = vpop.f32.mrf.mxu0
      %v2725 = vadd.f32 %v2660, %v2724
      %2726 = vmatmul.bf16.gmra.mxu0 %v2666
      %v2727 = vpop.f32.mrf.mxu0
      %v2728 = vadd.f32 %v2660, %v2727
      %v2729 = vpop.f32.mrf.mxu0
      %v2730 = vadd.f32 %v2660, %v2729
      %2731 = vmatmul.bf16.gmra.mxu0 %v2669
      %v2732 = vpop.f32.mrf.mxu0
      %v2733 = vadd.f32 %v2660, %v2732
      %v2734 = vpop.f32.mrf.mxu0
      %v2735 = vadd.f32 %v2660, %v2734
      %2736 = vmatmul.bf16.gmra.mxu0 %v2672
      %v2737 = vpop.f32.mrf.mxu0
      %v2738 = vadd.f32 %v2660, %v2737
      %v2739 = vpop.f32.mrf.mxu0
      %v2740 = vadd.f32 %v2660, %v2739
      %2741 = vmatmul.bf16.gmra.mxu0 %v2675
      %v2742 = vpop.f32.mrf.mxu0
      %v2743 = vadd.f32 %v2660, %v2742
      %v2744 = vpop.f32.mrf.mxu0
      %v2745 = vadd.f32 %v2660, %v2744
      %2746 = vmatmul.bf16.gmra.mxu0 %v2678
      %v2747 = vpop.f32.mrf.mxu0
      %v2748 = vadd.f32 %v2660, %v2747
      %v2749 = vpop.f32.mrf.mxu0
      %v2750 = vadd.f32 %v2660, %v2749
      %2751 = vmatmul.bf16.gmra.mxu0 %v2681
      %v2752 = vpop.f32.mrf.mxu0
      %v2753 = vadd.f32 %v2660, %v2752
      %v2754 = vpop.f32.mrf.mxu0
      %v2755 = vadd.f32 %v2660, %v2754
      %2756 = vmatmul.bf16.gmra.mxu0 %v2684
      %v2757 = vpop.f32.mrf.mxu0
      %v2758 = vadd.f32 %v2660, %v2757
      %v2759 = vpop.f32.mrf.mxu0
      %v2760 = vadd.f32 %v2660, %v2759
      %2761 = vmatmul.bf16.gmra.mxu0 %v2687
      %v2762 = vpop.f32.mrf.mxu0
      %v2763 = vadd.f32 %v2660, %v2762
      %v2764 = vpop.f32.mrf.mxu0
      %v2765 = vadd.f32 %v2660, %v2764
      %2766 = vmatmul.bf16.gmra.mxu0 %v2690
      %v2767 = vpop.f32.mrf.mxu0
      %v2768 = vadd.f32 %v2660, %v2767
      %v2769 = vpop.f32.mrf.mxu0
      %v2770 = vadd.f32 %v2660, %v2769
      %2771 = vmatmul.bf16.gmra.mxu0 %v2693
      %v2772 = vpop.f32.mrf.mxu0
      %v2773 = vadd.f32 %v2660, %v2772
      %v2774 = vpop.f32.mrf.mxu0
      %v2775 = vadd.f32 %v2660, %v2774
      %2776 = vmatmul.bf16.gmra.mxu0 %v2696
      %v2777 = vpop.f32.mrf.mxu0
      %v2778 = vadd.f32 %v2660, %v2777
      %v2779 = vpop.f32.mrf.mxu0
      %v2780 = vadd.f32 %v2660, %v2779
      %2781 = vmatmul.bf16.gmra.mxu0 %v2699
      %v2782 = vpop.f32.mrf.mxu0
      %v2783 = vadd.f32 %v2660, %v2782
      %v2784 = vpop.f32.mrf.mxu0
      %v2785 = vadd.f32 %v2660, %v2784
      %2786 = vmatmul.bf16.gmra.mxu0 %v2702
      %v2787 = vpop.f32.mrf.mxu0
      %v2788 = vadd.f32 %v2660, %v2787
      %v2789 = vpop.f32.mrf.mxu0
      %v2790 = vadd.f32 %v2660, %v2789
      %2791 = vmatmul.bf16.gmra.mxu0 %v2705
      %v2792 = vpop.f32.mrf.mxu0
      %v2793 = vadd.f32 %v2660, %v2792
      %v2794 = vpop.f32.mrf.mxu0
      %v2795 = vadd.f32 %v2660, %v2794
      %2796 = vmatmul.bf16.gmra.mxu0 %v2708
      %v2797 = vpop.f32.mrf.mxu0
      %v2798 = vadd.f32 %v2660, %v2797
      %v2799 = vpop.f32.mrf.mxu0
      %v2800 = vadd.f32 %v2660, %v2799
      %2801 = vdwg.mxu0
      %v2802 = vmax.f32 %v2723, 0.0
      %v2803 = vmax.f32 %v2725, 0.0
      %v2804 = vmax.f32 %v2728, 0.0
      %v2805 = vmax.f32 %v2730, 0.0
      %v2806 = vmax.f32 %v2733, 0.0
      %v2807 = vmax.f32 %v2735, 0.0
      %v2808 = vmax.f32 %v2738, 0.0
      %v2809 = vmax.f32 %v2740, 0.0
      %v2810 = vmax.f32 %v2743, 0.0
      %v2811 = vmax.f32 %v2745, 0.0
      %v2812 = vmax.f32 %v2748, 0.0
      %v2813 = vmax.f32 %v2750, 0.0
      %v2814 = vmax.f32 %v2753, 0.0
      %v2815 = vmax.f32 %v2755, 0.0
      %v2816 = vmax.f32 %v2758, 0.0
      %v2817 = vmax.f32 %v2760, 0.0
      %v2818 = vmax.f32 %v2763, 0.0
      %v2819 = vmax.f32 %v2765, 0.0
      %v2820 = vmax.f32 %v2768, 0.0
      %v2821 = vmax.f32 %v2770, 0.0
      %v2822 = vmax.f32 %v2773, 0.0
      %v2823 = vmax.f32 %v2775, 0.0
      %v2824 = vmax.f32 %v2778, 0.0
      %v2825 = vmax.f32 %v2780, 0.0
      %v2826 = vmax.f32 %v2783, 0.0
      %v2827 = vmax.f32 %v2785, 0.0
      %v2828 = vmax.f32 %v2788, 0.0
      %v2829 = vmax.f32 %v2790, 0.0
      %v2830 = vmax.f32 %v2793, 0.0
      %v2831 = vmax.f32 %v2795, 0.0
      %v2832 = vmax.f32 %v2798, 0.0
      %v2833 = vmax.f32 %v2800, 0.0
      %v2834 = vunpack.c.l.bf16 %v280
      %v2835 = vunpack.c.l.bf16 %v281
      %v2836 = vunpack.c.l.bf16 %v282
      %v2837 = vunpack.c.l.bf16 %v283
      %v2838 = vunpack.c.l.bf16 %v284
      %v2839 = vunpack.c.l.bf16 %v285
      %v2840 = vunpack.c.l.bf16 %v286
      %v2841 = vunpack.c.l.bf16 %v287
      %v2842 = vunpack.c.l.bf16 %v288
      %v2843 = vunpack.c.l.bf16 %v289
      %v2844 = vunpack.c.l.bf16 %v290
      %v2845 = vunpack.c.l.bf16 %v291
      %v2846 = vunpack.c.l.bf16 %v292
      %v2847 = vunpack.c.l.bf16 %v293
      %v2848 = vunpack.c.l.bf16 %v294
      %v2849 = vunpack.c.l.bf16 %v295
      %v2850 = vunpack.c.l.bf16 %v296
      %v2851 = vunpack.c.l.bf16 %v297
      %v2852 = vunpack.c.l.bf16 %v298
      %v2853 = vunpack.c.l.bf16 %v299
      %v2854 = vunpack.c.l.bf16 %v300
      %v2855 = vunpack.c.l.bf16 %v301
      %v2856 = vunpack.c.l.bf16 %v302
      %v2857 = vunpack.c.l.bf16 %v303
      %v2858 = vunpack.c.l.bf16 %v304
      %v2859 = vunpack.c.l.bf16 %v305
      %v2860 = vunpack.c.l.bf16 %v306
      %v2861 = vunpack.c.l.bf16 %v307
      %v2862 = vunpack.c.l.bf16 %v308
      %v2863 = vunpack.c.l.bf16 %v309
      %v2864 = vunpack.c.l.bf16 %v310
      %v2865 = vunpack.c.l.bf16 %v311
      %v2866 = vadd.f32 %v2802, %v2834
      %v2867 = vadd.f32 %v2803, %v2835
      %v2868 = vadd.f32 %v2804, %v2836
      %v2869 = vadd.f32 %v2805, %v2837
      %v2870 = vadd.f32 %v2806, %v2838
      %v2871 = vadd.f32 %v2807, %v2839
      %v2872 = vadd.f32 %v2808, %v2840
      %v2873 = vadd.f32 %v2809, %v2841
      %v2874 = vadd.f32 %v2810, %v2842
      %v2875 = vadd.f32 %v2811, %v2843
      %v2876 = vadd.f32 %v2812, %v2844
      %v2877 = vadd.f32 %v2813, %v2845
      %v2878 = vadd.f32 %v2814, %v2846
      %v2879 = vadd.f32 %v2815, %v2847
      %v2880 = vadd.f32 %v2816, %v2848
      %v2881 = vadd.f32 %v2817, %v2849
      %v2882 = vadd.f32 %v2818, %v2850
      %v2883 = vadd.f32 %v2819, %v2851
      %v2884 = vadd.f32 %v2820, %v2852
      %v2885 = vadd.f32 %v2821, %v2853
      %v2886 = vadd.f32 %v2822, %v2854
      %v2887 = vadd.f32 %v2823, %v2855
      %v2888 = vadd.f32 %v2824, %v2856
      %v2889 = vadd.f32 %v2825, %v2857
      %v2890 = vadd.f32 %v2826, %v2858
      %v2891 = vadd.f32 %v2827, %v2859
      %v2892 = vadd.f32 %v2828, %v2860
      %v2893 = vadd.f32 %v2829, %v2861
      %v2894 = vadd.f32 %v2830, %v2862
      %v2895 = vadd.f32 %v2831, %v2863
      %v2896 = vadd.f32 %v2832, %v2864
      %v2897 = vadd.f32 %v2833, %v2865
      %v2898 = vmax.f32 %v2866, 0.0
      %v2899 = vmax.f32 %v2867, 0.0
      %v2900 = vmax.f32 %v2868, 0.0
      %v2901 = vmax.f32 %v2869, 0.0
      %v2902 = vmax.f32 %v2870, 0.0
      %v2903 = vmax.f32 %v2871, 0.0
      %v2904 = vmax.f32 %v2872, 0.0
      %v2905 = vmax.f32 %v2873, 0.0
      %v2906 = vmax.f32 %v2874, 0.0
      %v2907 = vmax.f32 %v2875, 0.0
      %v2908 = vmax.f32 %v2876, 0.0
      %v2909 = vmax.f32 %v2877, 0.0
      %v2910 = vmax.f32 %v2878, 0.0
      %v2911 = vmax.f32 %v2879, 0.0
      %v2912 = vmax.f32 %v2880, 0.0
      %v2913 = vmax.f32 %v2881, 0.0
      %v2914 = vmax.f32 %v2882, 0.0
      %v2915 = vmax.f32 %v2883, 0.0
      %v2916 = vmax.f32 %v2884, 0.0
      %v2917 = vmax.f32 %v2885, 0.0
      %v2918 = vmax.f32 %v2886, 0.0
      %v2919 = vmax.f32 %v2887, 0.0
      %v2920 = vmax.f32 %v2888, 0.0
      %v2921 = vmax.f32 %v2889, 0.0
      %v2922 = vmax.f32 %v2890, 0.0
      %v2923 = vmax.f32 %v2891, 0.0
      %v2924 = vmax.f32 %v2892, 0.0
      %v2925 = vmax.f32 %v2893, 0.0
      %v2926 = vmax.f32 %v2894, 0.0
      %v2927 = vmax.f32 %v2895, 0.0
      %v2928 = vmax.f32 %v2896, 0.0
      %v2929 = vmax.f32 %v2897, 0.0
      %2930 = vst.msk [vmem:[%s278] sm:$0xff] %vm404, %v2898
      %2931 = vst.msk [vmem:[%s278 + $0x8] sm:$0xff] %vm404, %v2899
      %2932 = vst.msk [vmem:[%s278 + $0x10] sm:$0xff] %vm404, %v2900
      %2933 = vst.msk [vmem:[%s278 + $0x18] sm:$0xff] %vm404, %v2901
      %2934 = vst.msk [vmem:[%s278 + $0x20] sm:$0xff] %vm404, %v2902
      %2935 = vst.msk [vmem:[%s278 + $0x28] sm:$0xff] %vm404, %v2903
      %2936 = vst.msk [vmem:[%s278 + $0x30] sm:$0xff] %vm404, %v2904
      %2937 = vst.msk [vmem:[%s278 + $0x38] sm:$0xff] %vm404, %v2905
      %2938 = vst.msk [vmem:[%s278 + $0x40] sm:$0xff] %vm404, %v2906
      %2939 = vst.msk [vmem:[%s278 + $0x48] sm:$0xff] %vm404, %v2907
      %2940 = vst.msk [vmem:[%s278 + $0x50] sm:$0xff] %vm404, %v2908
      %2941 = vst.msk [vmem:[%s278 + $0x58] sm:$0xff] %vm404, %v2909
      %2942 = vst.msk [vmem:[%s278 + $0x60] sm:$0xff] %vm404, %v2910
      %2943 = vst.msk [vmem:[%s278 + $0x68] sm:$0xff] %vm404, %v2911
      %2944 = vst.msk [vmem:[%s278 + $0x70] sm:$0xff] %vm404, %v2912
      %2945 = vst.msk [vmem:[%s278 + $0x78] sm:$0xff] %vm404, %v2913
      %2946 = vst.msk [vmem:[%s278 + $0x80] sm:$0xff] %vm404, %v2914
      %2947 = vst.msk [vmem:[%s278 + $0x88] sm:$0xff] %vm404, %v2915
      %2948 = vst.msk [vmem:[%s278 + $0x90] sm:$0xff] %vm404, %v2916
      %2949 = vst.msk [vmem:[%s278 + $0x98] sm:$0xff] %vm404, %v2917
      %2950 = vst.msk [vmem:[%s278 + $0xa0] sm:$0xff] %vm404, %v2918
      %2951 = vst.msk [vmem:[%s278 + $0xa8] sm:$0xff] %vm404, %v2919
      %2952 = vst.msk [vmem:[%s278 + $0xb0] sm:$0xff] %vm404, %v2920
      %2953 = vst.msk [vmem:[%s278 + $0xb8] sm:$0xff] %vm404, %v2921
      %2954 = vst.msk [vmem:[%s278 + $0xc0] sm:$0xff] %vm404, %v2922
      %2955 = vst.msk [vmem:[%s278 + $0xc8] sm:$0xff] %vm404, %v2923
      %2956 = vst.msk [vmem:[%s278 + $0xd0] sm:$0xff] %vm404, %v2924
      %2957 = vst.msk [vmem:[%s278 + $0xd8] sm:$0xff] %vm404, %v2925
      %2958 = vst.msk [vmem:[%s278 + $0xe0] sm:$0xff] %vm404, %v2926
      %2959 = vst.msk [vmem:[%s278 + $0xe8] sm:$0xff] %vm404, %v2927
      %2960 = vst.msk [vmem:[%s278 + $0xf0] sm:$0xff] %vm404, %v2928
      %2961 = vst.msk [vmem:[%s278 + $0xf8] sm:$0xff] %vm404, %v2929
      %p2962 = scmp.lt.s32.totalorder %s18, 1
      %s2963 = scalar_select %p2962, %s18, 1
      %s2964 = smul.addr %s2963, 32
      %s2965 = smul.addr %s2964, 8
      %s2966 = scalar_lea.vmem %s7, %s2965
      // Predicated region
      $region49: #{bottleneck_pallas.1} parent=47 // pred_check
        %p2967 = pneg %p188
      $region50: #{bottleneck_pallas.1} parent=47 // pred_check_branch
        %2969 = sbr.rel (%p2967) target = $region52
      $region51: #{bottleneck_pallas.1} parent=47 // pred_region
        _
      $region52: #{bottleneck_pallas.1} parent=47 // pred_fallthru
        _
    $region48: #{bottleneck_pallas.1} parent=5 // pred_fallthru
      _
    %p2970 = scmp.le.s32.totalorder 2, %s13
    // Predicated region
    $region53: #{bottleneck_pallas.1} parent=5 // pred_check
      %p2971 = pneg %p2970
    $region54: #{bottleneck_pallas.1} parent=5 // pred_check_branch
      %2973 = sbr.rel (%p2971) target = $region56
    $region55: #{bottleneck_pallas.1} parent=5 // pred_region
      %s2974 = ssub.s32 %s13, 2
      // Predicated region
      $region57: #{bottleneck_pallas.1} parent=55 // pred_check
        %p2975 = pneg %p194
      $region58: #{bottleneck_pallas.1} parent=55 // pred_check_branch
        %2977 = sbr.rel (%p2975) target = $region60
      $region59: #{bottleneck_pallas.1} parent=55 // pred_region
        %p2978 = scmp.lt.s32.totalorder %s19, 1
        %s2979 = scalar_select %p2978, %s19, 1
        %s2980 = smul.addr %s2979, 32
        %s2981 = smul.addr %s2980, 8
        %s2982 = scalar_lea.vmem %s7, %s2981
      $region60: #{bottleneck_pallas.1} parent=55 // pred_fallthru
        _
    $region56: #{bottleneck_pallas.1} parent=5 // pred_fallthru
      _
  $region6: #{bottleneck_pallas.1} parent=0 // loop_footer
    %s17 = sadd.s32 1, %s13
  $region7: #{bottleneck_pallas.1} parent=0 // loop_footer_branch
    %12 = sbr.rel target = $region3
  $region8: #{bottleneck_pallas.1} parent=0 // loop_exit
    _

</llo_original>
